<compile_context>
chip_gen: v5e
topology: v5e:2x2
jax: 0.10.0
libtpu: 0.0.40
codegen_flags: <defaults>
</compile_context>

<pallas_src>
import jax
import jax.numpy as jnp
from jax.experimental import pallas as pl
from jax.experimental.pallas import tpu as pltpu


def _round_up(n, m):
    return ((n + m - 1) // m) * m


def discriminator_kernel(x_ref, w1_ref, b1_ref, w2_ref, b2_ref, w3_ref, b3_ref, o_ref):
    # Layer 1: Linear(1024 -> 512) + LeakyReLU(0.2)   (bf16 MXU, f32 accumulate)
    h1 = jnp.dot(x_ref[...], w1_ref[...], preferred_element_type=jnp.float32) + b1_ref[...]
    h1 = jnp.where(h1 > 0, h1, 0.2 * h1)

    # Layer 2: Linear(512 -> 256) + LeakyReLU(0.2)
    h2 = jnp.dot(h1.astype(jnp.bfloat16), w2_ref[...],
                 preferred_element_type=jnp.float32) + b2_ref[...]
    h2 = jnp.where(h2 > 0, h2, 0.2 * h2)

    # Layer 3: Linear(256 -> 1). N=1 MXU matmul is wasteful -> do it on the
    # VPU/XLU as an elementwise multiply + cross-lane reduction.
    w3_row = w3_ref[...].astype(jnp.float32)                       # [1, 256]
    z = jnp.sum(h2 * w3_row, axis=-1, keepdims=True) + b3_ref[...]  # [TB, 1]

    # Sigmoid: exp + approx reciprocal both go to the otherwise-idle EUP slot.
    o_ref[...] = pl.reciprocal(1.0 + jnp.exp(-z), approx=True).astype(o_ref.dtype)


def discriminator_forward(x, params, *, tile_batch=512):
    """x: [B, 1024] float32 -> validity: [B, 1] float32."""
    w1, b1, w2, b2, w3, b3 = params
    B = x.shape[0]

    # bf16 for MXU operands; biases stay f32 (added into the f32 accumulator).
    xb = x.astype(jnp.bfloat16)
    w1b = w1.astype(jnp.bfloat16)
    w2b = w2.astype(jnp.bfloat16)
    w3b = w3.reshape(1, 256).astype(jnp.bfloat16)   # transposed row for the reduction

    # Choose a batch tile (multiple of 8 sublanes) and pad B up to a whole
    # number of tiles. tile_batch=512 keeps per-step overhead negligible and
    # fills the MXU; small demo batches just use one small tile.
    tb = min(tile_batch, _round_up(B, 8))
    b_pad = _round_up(B, tb)
    if b_pad != B:
        xb = jnp.pad(xb, ((0, b_pad - B), (0, 0)))

    out = pl.pallas_call(
        discriminator_kernel,
        out_shape=jax.ShapeDtypeStruct((b_pad, 1), jnp.float32),
        grid_spec=pltpu.PrefetchScalarGridSpec(
            num_scalar_prefetch=0,
            grid=(b_pad // tb,),
            in_specs=[
                pl.BlockSpec((tb, 1024), lambda i: (i, 0)),   # x tile (pipelined)
                pl.BlockSpec((1024, 512), lambda i: (0, 0)),  # W1 (VMEM-resident)
                pl.BlockSpec((1, 512),    lambda i: (0, 0)),  # b1
                pl.BlockSpec((512, 256),  lambda i: (0, 0)),  # W2
                pl.BlockSpec((1, 256),    lambda i: (0, 0)),  # b2
                pl.BlockSpec((1, 256),    lambda i: (0, 0)),  # W3 (transposed row)
                pl.BlockSpec((1, 1),      lambda i: (0, 0)),  # b3
            ],
            out_specs=pl.BlockSpec((tb, 1), lambda i: (i, 0)),
        ),
        compiler_params=pltpu.CompilerParams(
            dimension_semantics=("parallel",),   # lets v7x shard batch tiles over 2 TCs
            vmem_limit_bytes=32 << 20,
        ),
    )(xb, w1b, b1, w2b, b2, w3b, b3)

    return out[:B]


def init_params(key):
    """Deterministic init mimicking PyTorch nn.Linear default
    (U[-1/sqrt(fan_in), +1/sqrt(fan_in)]). Weights stored as [in, out]."""
    dims = [(1024, 512), (512, 256), (256, 1)]
    params = []
    for i, (fan_in, fan_out) in enumerate(dims):
        kw, kb = jax.random.split(jax.random.fold_in(key, i))
        bound = 1.0 / (fan_in ** 0.5)
        w = jax.random.uniform(kw, (fan_in, fan_out), jnp.float32, -bound, bound)
        b = jax.random.uniform(kb, (1, fan_out), jnp.float32, -bound, bound)
        params.extend([w, b])
    return tuple(params)


def reference_forward(x, params):
    """Pure-JAX reference with the same bf16 operand / f32 accumulate semantics."""
    w1, b1, w2, b2, w3, b3 = params
    h1 = jnp.dot(x.astype(jnp.bfloat16), w1.astype(jnp.bfloat16),
                 preferred_element_type=jnp.float32) + b1
    h1 = jnp.where(h1 > 0, h1, 0.2 * h1)
    h2 = jnp.dot(h1.astype(jnp.bfloat16), w2.astype(jnp.bfloat16),
                 preferred_element_type=jnp.float32) + b2
    h2 = jnp.where(h2 > 0, h2, 0.2 * h2)
    z = jnp.dot(h2, w3) + b3
    return jax.nn.sigmoid(z)


if __name__ == "__main__":
    key = jax.random.PRNGKey(0)
    k_x, k_p = jax.random.split(key)
    params = init_params(k_p)

    # Small primary case (single tile).
    B = 8
    x = jax.random.normal(k_x, (B, 1024), jnp.float32)
    out = jax.block_until_ready(discriminator_forward(x, params))
    ref = reference_forward(x, params)
    assert out.shape == (B, 1), out.shape
    assert jnp.allclose(out, ref, atol=5e-3, rtol=5e-3), (
        f"max abs err = {float(jnp.max(jnp.abs(out - ref)))}"
    )

    # Second case exercising the multi-tile grid + batch padding path.
    B2 = 200
    x2 = jax.random.normal(jax.random.fold_in(k_x, 1), (B2, 1024), jnp.float32)
    out2 = jax.block_until_ready(discriminator_forward(x2, params, tile_batch=64))
    ref2 = reference_forward(x2, params)
    assert out2.shape == (B2, 1), out2.shape
    assert jnp.allclose(out2, ref2, atol=5e-3, rtol=5e-3), (
        f"max abs err = {float(jnp.max(jnp.abs(out2 - ref2)))}"
    )

    print("KERNEL_OK")
</pallas_src>

<mosaic_0001>
module attributes {stable_mosaic.version = 11 : i64} {
  func.func @discriminator_kernel(%arg0: i32, %arg1: memref<8x1024xbf16, #tpu.memory_space<vmem>>, %arg2: memref<1024x512xbf16, #tpu.memory_space<vmem>>, %arg3: memref<1x512xf32, #tpu.memory_space<vmem>>, %arg4: memref<512x256xbf16, #tpu.memory_space<vmem>>, %arg5: memref<1x256xf32, #tpu.memory_space<vmem>>, %arg6: memref<1x256xbf16, #tpu.memory_space<vmem>>, %arg7: memref<1x1xf32, #tpu.memory_space<vmem>>, %arg8: memref<8x1xf32, #tpu.memory_space<vmem>>) attributes {dimension_semantics = [#tpu.dimension_semantics<parallel>], iteration_bounds = array<i64: 1>, scalar_prefetch = 0 : i64, scratch_operands = 0 : i64, tpu.core_type = #tpu.core_type<tc>, window_params = [{transform_indices = @transform_0, window_bounds = array<i64: 8, 1024>}, {pipeline_mode = #tpu.pipeline_mode<synchronous>, transform_indices = @transform_1, window_bounds = array<i64: 1024, 512>}, {pipeline_mode = #tpu.pipeline_mode<synchronous>, transform_indices = @transform_2, window_bounds = array<i64: 1, 512>}, {pipeline_mode = #tpu.pipeline_mode<synchronous>, transform_indices = @transform_3, window_bounds = array<i64: 512, 256>}, {pipeline_mode = #tpu.pipeline_mode<synchronous>, transform_indices = @transform_4, window_bounds = array<i64: 1, 256>}, {pipeline_mode = #tpu.pipeline_mode<synchronous>, transform_indices = @transform_5, window_bounds = array<i64: 1, 256>}, {pipeline_mode = #tpu.pipeline_mode<synchronous>, transform_indices = @transform_6, window_bounds = array<i64: 1, 1>}, {transform_indices = @transform_7, window_bounds = array<i64: 8, 1>}]} {
    %c0 = arith.constant 0 : index
    %c0_0 = arith.constant 0 : index
    %0 = vector.load %arg1[%c0, %c0_0] : memref<8x1024xbf16, #tpu.memory_space<vmem>>, vector<8x1024xbf16>
    %c0_1 = arith.constant 0 : index
    %c0_2 = arith.constant 0 : index
    %1 = vector.load %arg2[%c0_1, %c0_2] : memref<1024x512xbf16, #tpu.memory_space<vmem>>, vector<1024x512xbf16>
    %cst = arith.constant dense<0.000000e+00> : vector<8x512xf32>
    %2 = tpu.matmul %0, %1, %cst {dimension_numbers = #tpu.dot_dimension_numbers<[1], [0], [0], [1], [0, 0, 1, 1], [], []>} : vector<8x1024xbf16>, vector<1024x512xbf16>, vector<8x512xf32> -> vector<8x512xf32>
    %c0_3 = arith.constant 0 : index
    %c0_4 = arith.constant 0 : index
    %3 = vector.load %arg3[%c0_3, %c0_4] : memref<1x512xf32, #tpu.memory_space<vmem>>, vector<1x512xf32>
    %4 = vector.broadcast %3 : vector<1x512xf32> to vector<8x512xf32>
    %5 = arith.addf %2, %4 : vector<8x512xf32>
    %cst_5 = arith.constant 0.000000e+00 : f32
    %6 = vector.broadcast %cst_5 : f32 to vector<8x512xf32>
    %7 = arith.cmpf ogt, %5, %6 : vector<8x512xf32>
    %cst_6 = arith.constant 2.000000e-01 : f32
    %8 = vector.broadcast %cst_6 : f32 to vector<8x512xf32>
    %9 = arith.mulf %8, %5 : vector<8x512xf32>
    %10 = arith.select %7, %5, %9 : vector<8x512xi1>, vector<8x512xf32>
    %11 = arith.truncf %10 : vector<8x512xf32> to vector<8x512xbf16>
    %c0_7 = arith.constant 0 : index
    %c0_8 = arith.constant 0 : index
    %12 = vector.load %arg4[%c0_7, %c0_8] : memref<512x256xbf16, #tpu.memory_space<vmem>>, vector<512x256xbf16>
    %cst_9 = arith.constant dense<0.000000e+00> : vector<8x256xf32>
    %13 = tpu.matmul %11, %12, %cst_9 {dimension_numbers = #tpu.dot_dimension_numbers<[1], [0], [0], [1], [0, 0, 1, 1], [], []>} : vector<8x512xbf16>, vector<512x256xbf16>, vector<8x256xf32> -> vector<8x256xf32>
    %c0_10 = arith.constant 0 : index
    %c0_11 = arith.constant 0 : index
    %14 = vector.load %arg5[%c0_10, %c0_11] : memref<1x256xf32, #tpu.memory_space<vmem>>, vector<1x256xf32>
    %15 = vector.broadcast %14 : vector<1x256xf32> to vector<8x256xf32>
    %16 = arith.addf %13, %15 : vector<8x256xf32>
    %cst_12 = arith.constant 0.000000e+00 : f32
    %17 = vector.broadcast %cst_12 : f32 to vector<8x256xf32>
    %18 = arith.cmpf ogt, %16, %17 : vector<8x256xf32>
    %cst_13 = arith.constant 2.000000e-01 : f32
    %19 = vector.broadcast %cst_13 : f32 to vector<8x256xf32>
    %20 = arith.mulf %19, %16 : vector<8x256xf32>
    %21 = arith.select %18, %16, %20 : vector<8x256xi1>, vector<8x256xf32>
    %c0_14 = arith.constant 0 : index
    %c0_15 = arith.constant 0 : index
    %22 = vector.load %arg6[%c0_14, %c0_15] : memref<1x256xbf16, #tpu.memory_space<vmem>>, vector<1x256xbf16>
    %23 = arith.extf %22 : vector<1x256xbf16> to vector<1x256xf32>
    %24 = vector.broadcast %23 : vector<1x256xf32> to vector<8x256xf32>
    %25 = arith.mulf %21, %24 : vector<8x256xf32>
    %cst_16 = arith.constant dense<0.000000e+00> : vector<8xf32>
    %26 = vector.multi_reduction <add>, %25, %cst_16 [1] : vector<8x256xf32> to vector<8xf32>
    %27 = vector.shape_cast %26 : vector<8xf32> to vector<8x1xf32>
    %c0_17 = arith.constant 0 : index
    %c0_18 = arith.constant 0 : index
    %28 = vector.load %arg7[%c0_17, %c0_18] : memref<1x1xf32, #tpu.memory_space<vmem>>, vector<1x1xf32>
    %29 = vector.broadcast %28 : vector<1x1xf32> to vector<8x1xf32>
    %30 = arith.addf %27, %29 : vector<8x1xf32>
    %cst_19 = arith.constant 0.000000e+00 : f32
    %31 = vector.broadcast %cst_19 : f32 to vector<8x1xf32>
    %32 = arith.subf %31, %30 : vector<8x1xf32>
    %33 = math.exp %32 : vector<8x1xf32>
    %cst_20 = arith.constant 1.000000e+00 : f32
    %34 = vector.broadcast %cst_20 : f32 to vector<8x1xf32>
    %35 = arith.addf %34, %33 : vector<8x1xf32>
    %36 = tpu.reciprocal %35 {approx = true} : vector<8x1xf32> -> vector<8x1xf32>
    %c0_21 = arith.constant 0 : index
    %c0_22 = arith.constant 0 : index
    %37 = vector.load %arg8[%c0_21, %c0_22] : memref<8x1xf32, #tpu.memory_space<vmem>>, vector<8x1xf32>
    tpu.vector_store %arg8[%c0_21, %c0_22], %36 {strides = array<i32>} : memref<8x1xf32, #tpu.memory_space<vmem>>, vector<8x1xf32>,
    return
  }
  func.func @transform_0(%arg0: i32) -> (i32, i32) {
    %c0_i32 = arith.constant 0 : i32
    %c0_i32_0 = arith.constant 0 : i32
    return %arg0, %c0_i32 : i32, i32
  }
  func.func @transform_1(%arg0: i32) -> (i32, i32) {
    %c0_i32 = arith.constant 0 : i32
    %c0_i32_0 = arith.constant 0 : i32
    %c0_i32_1 = arith.constant 0 : i32
    return %c0_i32, %c0_i32_0 : i32, i32
  }
  func.func @transform_2(%arg0: i32) -> (i32, i32) {
    %c0_i32 = arith.constant 0 : i32
    %c0_i32_0 = arith.constant 0 : i32
    %c0_i32_1 = arith.constant 0 : i32
    return %c0_i32, %c0_i32_0 : i32, i32
  }
  func.func @transform_3(%arg0: i32) -> (i32, i32) {
    %c0_i32 = arith.constant 0 : i32
    %c0_i32_0 = arith.constant 0 : i32
    %c0_i32_1 = arith.constant 0 : i32
    return %c0_i32, %c0_i32_0 : i32, i32
  }
  func.func @transform_4(%arg0: i32) -> (i32, i32) {
    %c0_i32 = arith.constant 0 : i32
    %c0_i32_0 = arith.constant 0 : i32
    %c0_i32_1 = arith.constant 0 : i32
    return %c0_i32, %c0_i32_0 : i32, i32
  }
  func.func @transform_5(%arg0: i32) -> (i32, i32) {
    %c0_i32 = arith.constant 0 : i32
    %c0_i32_0 = arith.constant 0 : i32
    %c0_i32_1 = arith.constant 0 : i32
    return %c0_i32, %c0_i32_0 : i32, i32
  }
  func.func @transform_6(%arg0: i32) -> (i32, i32) {
    %c0_i32 = arith.constant 0 : i32
    %c0_i32_0 = arith.constant 0 : i32
    %c0_i32_1 = arith.constant 0 : i32
    return %c0_i32, %c0_i32_0 : i32, i32
  }
  func.func @transform_7(%arg0: i32) -> (i32, i32) {
    %c0_i32 = arith.constant 0 : i32
    %c0_i32_0 = arith.constant 0 : i32
    return %arg0, %c0_i32 : i32, i32
  }
}

</mosaic_0001>

<llo_original>
// kernel: tpu_custom_call.1
$region0: #{tpu_custom_call.1}
  #allocation0 [shape = 'u32[]', space=smem, size = 0x4, offset = 0x4, fixed_abs, tag = 'smem constant byte address 0x4 - core index']
  #allocation1 [shape = 'u32[72,128]{1,0:T(1,128)}', space=vmem, size = 0x9000, scoped, tag = 'internal scratch']
  #allocation2 [shape = 'f32[1,1]{1,0:T(1,128)S(1)}', space=vmem, size = 0x200, scoped, tag = 'scoped memory for tpu_custom_call.1']
  %s0 = inlined_call_operand.hbm [shape: bf16[8,1024], index: 0, kind: input, shape index: {}]
  %s1 = inlined_call_operand.hbm [shape: bf16[1024,512], index: 1, kind: input, shape index: {}]
  %s2 = inlined_call_operand.hbm [shape: f32[1,512], index: 2, kind: input, shape index: {}]
  %s3 = inlined_call_operand.hbm [shape: bf16[512,256], index: 3, kind: input, shape index: {}]
  %s4 = inlined_call_operand.vmem [shape: f32[1,256], index: 4, kind: input, shape index: {}]
  %s5 = inlined_call_operand.vmem [shape: bf16[1,256], index: 5, kind: input, shape index: {}]
  %s6 = inlined_call_operand.<no memory space> [shape: f32[1,1], index: 6, kind: input, shape index: {}]
  %s7 = inlined_call_operand.vmem [shape: f32[8,1], index: 7, kind: output, shape index: {}]
  %s8 = sld [smem:[#allocation0]]
  $region54: #{tpu_custom_call.1} parent=0
    _
  %s10 = ssub.s32 1, %s8
  %s11 = scalar_select 0, %s10, %s8
  %v12 = vstv %s6
  %13 = vst [vmem:[#allocation2] sm:$0x1] %v12
  $region1: #{tpu_custom_call.1} parent=0
    #allocation3 [shape = 'u8[16384]{0}', space=vmem, size = 0x4000, scoped, tag = 'input window, operand 0, single buffered']
    #allocation4 [shape = 's32[1]{0}', space=sflag, size = 0x4, scoped, tag = 'scoped memory for tpu_custom_call.1']
    #allocation5 [shape = 'u8[1048576]{0}', space=vmem, size = 0x100000, scoped, tag = 'input window, operand 1, single buffered']
    #allocation6 [shape = 's32[1]{0}', space=sflag, size = 0x4, scoped, tag = 'scoped memory for tpu_custom_call.1']
    #allocation7 [shape = 'u8[2048]{0}', space=vmem, size = 0x800, scoped, tag = 'input window, operand 2, single buffered']
    #allocation8 [shape = 'u8[262144]{0}', space=vmem, size = 0x40000, scoped, tag = 'input window, operand 3, single buffered']
    #allocation9 [shape = 's32[1]{0}', space=sflag, size = 0x4, scoped, tag = 'scoped memory for tpu_custom_call.1']
    %14 = vsyncpa [#allocation4], 0
    %15 = vsyncpa [#allocation6], 0
    %16 = vsyncpa [#allocation9], 0
    // Predicated region
    $region2: #{tpu_custom_call.1} parent=1 // pred_check
      _
    $region3: #{tpu_custom_call.1} parent=1 // pred_check_branch
      %18 = sbr.rel (0) target = $region5
    $region4: #{tpu_custom_call.1} parent=1 // pred_region
      %20 = vsyncadd [#allocation4], 0
      %s22 = sshll.u32 %s0, 4
      %s23 = int_to_ptr.hbm [resolvable:$true] %s22
      %s24 = sshll.u32 [#allocation3], 4
      %s25 = int_to_ptr.vmem [resolvable:$true] %s24
      %27 = dma.hbm_to_vmem [thread:$0]  %s23, 512, %s25, [#allocation4]
    $region5: #{tpu_custom_call.1} parent=1 // pred_fallthru
      _
    // Predicated region
    $region6: #{tpu_custom_call.1} parent=1 // pred_check
      _
    $region7: #{tpu_custom_call.1} parent=1 // pred_check_branch
      %29 = sbr.rel (0) target = $region9
    $region8: #{tpu_custom_call.1} parent=1 // pred_region
      %31 = vsyncadd [#allocation6], 0
      %s32 = sshll.u32 %s1, 4
      %s33 = int_to_ptr.hbm [resolvable:$true] %s32
      %s34 = sshll.u32 [#allocation5], 4
      %s35 = int_to_ptr.vmem [resolvable:$true] %s34
      %40 = dma.hbm_to_vmem [thread:$0]  %s33, 32768, %s35, [#allocation6], 256, 256, 16
    $region9: #{tpu_custom_call.1} parent=1 // pred_fallthru
      _
    // Predicated region
    $region10: #{tpu_custom_call.1} parent=1 // pred_check
      _
    $region11: #{tpu_custom_call.1} parent=1 // pred_check_branch
      %42 = sbr.rel (0) target = $region13
    $region12: #{tpu_custom_call.1} parent=1 // pred_region
      %44 = vsyncadd [#allocation6], 0
      %s46 = sshll.u32 %s2, 4
      %s47 = int_to_ptr.hbm [resolvable:$true] %s46
      %s48 = sshll.u32 [#allocation7], 4
      %s49 = int_to_ptr.vmem [resolvable:$true] %s48
      %51 = dma.hbm_to_vmem [thread:$0]  %s47, 64, %s49, [#allocation6]
    $region13: #{tpu_custom_call.1} parent=1 // pred_fallthru
      _
    // Predicated region
    $region14: #{tpu_custom_call.1} parent=1 // pred_check
      _
    $region15: #{tpu_custom_call.1} parent=1 // pred_check_branch
      %53 = sbr.rel (0) target = $region17
    $region16: #{tpu_custom_call.1} parent=1 // pred_region
      %55 = vsyncadd [#allocation9], 0
      %s56 = sshll.u32 %s3, 4
      %s57 = int_to_ptr.hbm [resolvable:$true] %s56
      %s58 = sshll.u32 [#allocation8], 4
      %s59 = int_to_ptr.vmem [resolvable:$true] %s58
      %64 = dma.hbm_to_vmem [thread:$0]  %s57, 8192, %s59, [#allocation9], 128, 128, 8
    $region17: #{tpu_custom_call.1} parent=1 // pred_fallthru
      _
    // Predicated region
    $region18: #{tpu_custom_call.1} parent=1 // pred_check
      _
    $region19: #{tpu_custom_call.1} parent=1 // pred_check_branch
      %66 = sbr.rel (0) target = $region21
    $region20: #{tpu_custom_call.1} parent=1 // pred_region
      _
    $region21: #{tpu_custom_call.1} parent=1 // pred_fallthru
      _
    // Predicated region
    $region22: #{tpu_custom_call.1} parent=1 // pred_check
      _
    $region23: #{tpu_custom_call.1} parent=1 // pred_check_branch
      %68 = sbr.rel (0) target = $region25
    $region24: #{tpu_custom_call.1} parent=1 // pred_region
      _
    $region25: #{tpu_custom_call.1} parent=1 // pred_fallthru
      _
    // Predicated region
    $region26: #{tpu_custom_call.1} parent=1 // pred_check
      _
    $region27: #{tpu_custom_call.1} parent=1 // pred_check_branch
      %70 = sbr.rel (0) target = $region29
    $region28: #{tpu_custom_call.1} parent=1 // pred_region
      _
    $region29: #{tpu_custom_call.1} parent=1 // pred_fallthru
      _
    // Predicated region
    $region30: #{tpu_custom_call.1} parent=1 // pred_check
      _
    $region31: #{tpu_custom_call.1} parent=1 // pred_check_branch
      %72 = sbr.rel (0) target = $region33
    $region32: #{tpu_custom_call.1} parent=1 // pred_region
      %74 = dma.done [#allocation4], 512
    $region33: #{tpu_custom_call.1} parent=1 // pred_fallthru
      _
    // Predicated region
    $region34: #{tpu_custom_call.1} parent=1 // pred_check
      _
    $region35: #{tpu_custom_call.1} parent=1 // pred_check_branch
      %76 = sbr.rel (0) target = $region37
    $region36: #{tpu_custom_call.1} parent=1 // pred_region
      %78 = dma.done [#allocation6], 32768
    $region37: #{tpu_custom_call.1} parent=1 // pred_fallthru
      _
    // Predicated region
    $region38: #{tpu_custom_call.1} parent=1 // pred_check
      _
    $region39: #{tpu_custom_call.1} parent=1 // pred_check_branch
      %80 = sbr.rel (0) target = $region41
    $region40: #{tpu_custom_call.1} parent=1 // pred_region
      %82 = dma.done [#allocation6], 64
    $region41: #{tpu_custom_call.1} parent=1 // pred_fallthru
      _
    // Predicated region
    $region42: #{tpu_custom_call.1} parent=1 // pred_check
      _
    $region43: #{tpu_custom_call.1} parent=1 // pred_check_branch
      %84 = sbr.rel (0) target = $region45
    $region44: #{tpu_custom_call.1} parent=1 // pred_region
      %86 = dma.done [#allocation9], 8192
    $region45: #{tpu_custom_call.1} parent=1 // pred_fallthru
      _
    %v87 = vld [vmem:[#allocation3] sm:$0xff]
    %v88 = vld [vmem:[#allocation3 + $0x8] sm:$0xff]
    %v89 = vld [vmem:[#allocation3 + $0x10] sm:$0xff]
    %v90 = vld [vmem:[#allocation3 + $0x18] sm:$0xff]
    %v91 = vld [vmem:[#allocation5] sm:$0xff]
    %v92 = vld [vmem:[#allocation5 + $0x8] sm:$0xff]
    %v93 = vld [vmem:[#allocation5 + $0x10] sm:$0xff]
    %v94 = vld [vmem:[#allocation5 + $0x18] sm:$0xff]
    %v95 = vld [vmem:[#allocation5 + $0x20] sm:$0xff]
    %v96 = vld [vmem:[#allocation5 + $0x28] sm:$0xff]
    %v97 = vld [vmem:[#allocation5 + $0x30] sm:$0xff]
    %v98 = vld [vmem:[#allocation5 + $0x38] sm:$0xff]
    %v99 = vld [vmem:[#allocation5 + $0x40] sm:$0xff]
    %v100 = vld [vmem:[#allocation5 + $0x48] sm:$0xff]
    %v101 = vld [vmem:[#allocation5 + $0x50] sm:$0xff]
    %v102 = vld [vmem:[#allocation5 + $0x58] sm:$0xff]
    %v103 = vld [vmem:[#allocation5 + $0x60] sm:$0xff]
    %v104 = vld [vmem:[#allocation5 + $0x68] sm:$0xff]
    %v105 = vld [vmem:[#allocation5 + $0x70] sm:$0xff]
    %v106 = vld [vmem:[#allocation5 + $0x78] sm:$0xff]
    %v107 = vld [vmem:[#allocation5 + $0x80] sm:$0xff]
    %v108 = vld [vmem:[#allocation5 + $0x88] sm:$0xff]
    %v109 = vld [vmem:[#allocation5 + $0x90] sm:$0xff]
    %v110 = vld [vmem:[#allocation5 + $0x98] sm:$0xff]
    %v111 = vld [vmem:[#allocation5 + $0xa0] sm:$0xff]
    %v112 = vld [vmem:[#allocation5 + $0xa8] sm:$0xff]
    %v113 = vld [vmem:[#allocation5 + $0xb0] sm:$0xff]
    %v114 = vld [vmem:[#allocation5 + $0xb8] sm:$0xff]
    %v115 = vld [vmem:[#allocation5 + $0xc0] sm:$0xff]
    %v116 = vld [vmem:[#allocation5 + $0xc8] sm:$0xff]
    %v117 = vld [vmem:[#allocation5 + $0xd0] sm:$0xff]
    %v118 = vld [vmem:[#allocation5 + $0xd8] sm:$0xff]
    %v119 = vld [vmem:[#allocation5 + $0xe0] sm:$0xff]
    %v120 = vld [vmem:[#allocation5 + $0xe8] sm:$0xff]
    %v121 = vld [vmem:[#allocation5 + $0xf0] sm:$0xff]
    %v122 = vld [vmem:[#allocation5 + $0xf8] sm:$0xff]
    %v123 = vld [vmem:[#allocation5 + $0x100] sm:$0xff]
    %v124 = vld [vmem:[#allocation5 + $0x108] sm:$0xff]
    %v125 = vld [vmem:[#allocation5 + $0x110] sm:$0xff]
    %v126 = vld [vmem:[#allocation5 + $0x118] sm:$0xff]
    %v127 = vld [vmem:[#allocation5 + $0x120] sm:$0xff]
    %v128 = vld [vmem:[#allocation5 + $0x128] sm:$0xff]
    %v129 = vld [vmem:[#allocation5 + $0x130] sm:$0xff]
    %v130 = vld [vmem:[#allocation5 + $0x138] sm:$0xff]
    %v131 = vld [vmem:[#allocation5 + $0x140] sm:$0xff]
    %v132 = vld [vmem:[#allocation5 + $0x148] sm:$0xff]
    %v133 = vld [vmem:[#allocation5 + $0x150] sm:$0xff]
    %v134 = vld [vmem:[#allocation5 + $0x158] sm:$0xff]
    %v135 = vld [vmem:[#allocation5 + $0x160] sm:$0xff]
    %v136 = vld [vmem:[#allocation5 + $0x168] sm:$0xff]
    %v137 = vld [vmem:[#allocation5 + $0x170] sm:$0xff]
    %v138 = vld [vmem:[#allocation5 + $0x178] sm:$0xff]
    %v139 = vld [vmem:[#allocation5 + $0x180] sm:$0xff]
    %v140 = vld [vmem:[#allocation5 + $0x188] sm:$0xff]
    %v141 = vld [vmem:[#allocation5 + $0x190] sm:$0xff]
    %v142 = vld [vmem:[#allocation5 + $0x198] sm:$0xff]
    %v143 = vld [vmem:[#allocation5 + $0x1a0] sm:$0xff]
    %v144 = vld [vmem:[#allocation5 + $0x1a8] sm:$0xff]
    %v145 = vld [vmem:[#allocation5 + $0x1b0] sm:$0xff]
    %v146 = vld [vmem:[#allocation5 + $0x1b8] sm:$0xff]
    %v147 = vld [vmem:[#allocation5 + $0x1c0] sm:$0xff]
    %v148 = vld [vmem:[#allocation5 + $0x1c8] sm:$0xff]
    %v149 = vld [vmem:[#allocation5 + $0x1d0] sm:$0xff]
    %v150 = vld [vmem:[#allocation5 + $0x1d8] sm:$0xff]
    %v151 = vld [vmem:[#allocation5 + $0x1e0] sm:$0xff]
    %v152 = vld [vmem:[#allocation5 + $0x1e8] sm:$0xff]
    %v153 = vld [vmem:[#allocation5 + $0x1f0] sm:$0xff]
    %v154 = vld [vmem:[#allocation5 + $0x1f8] sm:$0xff]
    %v155 = vld [vmem:[#allocation5 + $0x200] sm:$0xff]
    %v156 = vld [vmem:[#allocation5 + $0x208] sm:$0xff]
    %v157 = vld [vmem:[#allocation5 + $0x210] sm:$0xff]
    %v158 = vld [vmem:[#allocation5 + $0x218] sm:$0xff]
    %v159 = vld [vmem:[#allocation5 + $0x220] sm:$0xff]
    %v160 = vld [vmem:[#allocation5 + $0x228] sm:$0xff]
    %v161 = vld [vmem:[#allocation5 + $0x230] sm:$0xff]
    %v162 = vld [vmem:[#allocation5 + $0x238] sm:$0xff]
    %v163 = vld [vmem:[#allocation5 + $0x240] sm:$0xff]
    %v164 = vld [vmem:[#allocation5 + $0x248] sm:$0xff]
    %v165 = vld [vmem:[#allocation5 + $0x250] sm:$0xff]
    %v166 = vld [vmem:[#allocation5 + $0x258] sm:$0xff]
    %v167 = vld [vmem:[#allocation5 + $0x260] sm:$0xff]
    %v168 = vld [vmem:[#allocation5 + $0x268] sm:$0xff]
    %v169 = vld [vmem:[#allocation5 + $0x270] sm:$0xff]
    %v170 = vld [vmem:[#allocation5 + $0x278] sm:$0xff]
    %v171 = vld [vmem:[#allocation5 + $0x280] sm:$0xff]
    %v172 = vld [vmem:[#allocation5 + $0x288] sm:$0xff]
    %v173 = vld [vmem:[#allocation5 + $0x290] sm:$0xff]
    %v174 = vld [vmem:[#allocation5 + $0x298] sm:$0xff]
    %v175 = vld [vmem:[#allocation5 + $0x2a0] sm:$0xff]
    %v176 = vld [vmem:[#allocation5 + $0x2a8] sm:$0xff]
    %v177 = vld [vmem:[#allocation5 + $0x2b0] sm:$0xff]
    %v178 = vld [vmem:[#allocation5 + $0x2b8] sm:$0xff]
    %v179 = vld [vmem:[#allocation5 + $0x2c0] sm:$0xff]
    %v180 = vld [vmem:[#allocation5 + $0x2c8] sm:$0xff]
    %v181 = vld [vmem:[#allocation5 + $0x2d0] sm:$0xff]
    %v182 = vld [vmem:[#allocation5 + $0x2d8] sm:$0xff]
    %v183 = vld [vmem:[#allocation5 + $0x2e0] sm:$0xff]
    %v184 = vld [vmem:[#allocation5 + $0x2e8] sm:$0xff]
    %v185 = vld [vmem:[#allocation5 + $0x2f0] sm:$0xff]
    %v186 = vld [vmem:[#allocation5 + $0x2f8] sm:$0xff]
    %v187 = vld [vmem:[#allocation5 + $0x300] sm:$0xff]
    %v188 = vld [vmem:[#allocation5 + $0x308] sm:$0xff]
    %v189 = vld [vmem:[#allocation5 + $0x310] sm:$0xff]
    %v190 = vld [vmem:[#allocation5 + $0x318] sm:$0xff]
    %v191 = vld [vmem:[#allocation5 + $0x320] sm:$0xff]
    %v192 = vld [vmem:[#allocation5 + $0x328] sm:$0xff]
    %v193 = vld [vmem:[#allocation5 + $0x330] sm:$0xff]
    %v194 = vld [vmem:[#allocation5 + $0x338] sm:$0xff]
    %v195 = vld [vmem:[#allocation5 + $0x340] sm:$0xff]
    %v196 = vld [vmem:[#allocation5 + $0x348] sm:$0xff]
    %v197 = vld [vmem:[#allocation5 + $0x350] sm:$0xff]
    %v198 = vld [vmem:[#allocation5 + $0x358] sm:$0xff]
    %v199 = vld [vmem:[#allocation5 + $0x360] sm:$0xff]
    %v200 = vld [vmem:[#allocation5 + $0x368] sm:$0xff]
    %v201 = vld [vmem:[#allocation5 + $0x370] sm:$0xff]
    %v202 = vld [vmem:[#allocation5 + $0x378] sm:$0xff]
    %v203 = vld [vmem:[#allocation5 + $0x380] sm:$0xff]
    %v204 = vld [vmem:[#allocation5 + $0x388] sm:$0xff]
    %v205 = vld [vmem:[#allocation5 + $0x390] sm:$0xff]
    %v206 = vld [vmem:[#allocation5 + $0x398] sm:$0xff]
    %v207 = vld [vmem:[#allocation5 + $0x3a0] sm:$0xff]
    %v208 = vld [vmem:[#allocation5 + $0x3a8] sm:$0xff]
    %v209 = vld [vmem:[#allocation5 + $0x3b0] sm:$0xff]
    %v210 = vld [vmem:[#allocation5 + $0x3b8] sm:$0xff]
    %v211 = vld [vmem:[#allocation5 + $0x3c0] sm:$0xff]
    %v212 = vld [vmem:[#allocation5 + $0x3c8] sm:$0xff]
    %v213 = vld [vmem:[#allocation5 + $0x3d0] sm:$0xff]
    %v214 = vld [vmem:[#allocation5 + $0x3d8] sm:$0xff]
    %v215 = vld [vmem:[#allocation5 + $0x3e0] sm:$0xff]
    %v216 = vld [vmem:[#allocation5 + $0x3e8] sm:$0xff]
    %v217 = vld [vmem:[#allocation5 + $0x3f0] sm:$0xff]
    %v218 = vld [vmem:[#allocation5 + $0x3f8] sm:$0xff]
    %v219 = vld [vmem:[#allocation5 + $0x400] sm:$0xff]
    %v220 = vld [vmem:[#allocation5 + $0x408] sm:$0xff]
    %v221 = vld [vmem:[#allocation5 + $0x410] sm:$0xff]
    %v222 = vld [vmem:[#allocation5 + $0x418] sm:$0xff]
    %v223 = vld [vmem:[#allocation5 + $0x420] sm:$0xff]
    %v224 = vld [vmem:[#allocation5 + $0x428] sm:$0xff]
    %v225 = vld [vmem:[#allocation5 + $0x430] sm:$0xff]
    %v226 = vld [vmem:[#allocation5 + $0x438] sm:$0xff]
    %v227 = vld [vmem:[#allocation5 + $0x440] sm:$0xff]
    %v228 = vld [vmem:[#allocation5 + $0x448] sm:$0xff]
    %v229 = vld [vmem:[#allocation5 + $0x450] sm:$0xff]
    %v230 = vld [vmem:[#allocation5 + $0x458] sm:$0xff]
    %v231 = vld [vmem:[#allocation5 + $0x460] sm:$0xff]
    %v232 = vld [vmem:[#allocation5 + $0x468] sm:$0xff]
    %v233 = vld [vmem:[#allocation5 + $0x470] sm:$0xff]
    %v234 = vld [vmem:[#allocation5 + $0x478] sm:$0xff]
    %v235 = vld [vmem:[#allocation5 + $0x480] sm:$0xff]
    %v236 = vld [vmem:[#allocation5 + $0x488] sm:$0xff]
    %v237 = vld [vmem:[#allocation5 + $0x490] sm:$0xff]
    %v238 = vld [vmem:[#allocation5 + $0x498] sm:$0xff]
    %v239 = vld [vmem:[#allocation5 + $0x4a0] sm:$0xff]
    %v240 = vld [vmem:[#allocation5 + $0x4a8] sm:$0xff]
    %v241 = vld [vmem:[#allocation5 + $0x4b0] sm:$0xff]
    %v242 = vld [vmem:[#allocation5 + $0x4b8] sm:$0xff]
    %v243 = vld [vmem:[#allocation5 + $0x4c0] sm:$0xff]
    %v244 = vld [vmem:[#allocation5 + $0x4c8] sm:$0xff]
    %v245 = vld [vmem:[#allocation5 + $0x4d0] sm:$0xff]
    %v246 = vld [vmem:[#allocation5 + $0x4d8] sm:$0xff]
    %v247 = vld [vmem:[#allocation5 + $0x4e0] sm:$0xff]
    %v248 = vld [vmem:[#allocation5 + $0x4e8] sm:$0xff]
    %v249 = vld [vmem:[#allocation5 + $0x4f0] sm:$0xff]
    %v250 = vld [vmem:[#allocation5 + $0x4f8] sm:$0xff]
    %v251 = vld [vmem:[#allocation5 + $0x500] sm:$0xff]
    %v252 = vld [vmem:[#allocation5 + $0x508] sm:$0xff]
    %v253 = vld [vmem:[#allocation5 + $0x510] sm:$0xff]
    %v254 = vld [vmem:[#allocation5 + $0x518] sm:$0xff]
    %v255 = vld [vmem:[#allocation5 + $0x520] sm:$0xff]
    %v256 = vld [vmem:[#allocation5 + $0x528] sm:$0xff]
    %v257 = vld [vmem:[#allocation5 + $0x530] sm:$0xff]
    %v258 = vld [vmem:[#allocation5 + $0x538] sm:$0xff]
    %v259 = vld [vmem:[#allocation5 + $0x540] sm:$0xff]
    %v260 = vld [vmem:[#allocation5 + $0x548] sm:$0xff]
    %v261 = vld [vmem:[#allocation5 + $0x550] sm:$0xff]
    %v262 = vld [vmem:[#allocation5 + $0x558] sm:$0xff]
    %v263 = vld [vmem:[#allocation5 + $0x560] sm:$0xff]
    %v264 = vld [vmem:[#allocation5 + $0x568] sm:$0xff]
    %v265 = vld [vmem:[#allocation5 + $0x570] sm:$0xff]
    %v266 = vld [vmem:[#allocation5 + $0x578] sm:$0xff]
    %v267 = vld [vmem:[#allocation5 + $0x580] sm:$0xff]
    %v268 = vld [vmem:[#allocation5 + $0x588] sm:$0xff]
    %v269 = vld [vmem:[#allocation5 + $0x590] sm:$0xff]
    %v270 = vld [vmem:[#allocation5 + $0x598] sm:$0xff]
    %v271 = vld [vmem:[#allocation5 + $0x5a0] sm:$0xff]
    %v272 = vld [vmem:[#allocation5 + $0x5a8] sm:$0xff]
    %v273 = vld [vmem:[#allocation5 + $0x5b0] sm:$0xff]
    %v274 = vld [vmem:[#allocation5 + $0x5b8] sm:$0xff]
    %v275 = vld [vmem:[#allocation5 + $0x5c0] sm:$0xff]
    %v276 = vld [vmem:[#allocation5 + $0x5c8] sm:$0xff]
    %v277 = vld [vmem:[#allocation5 + $0x5d0] sm:$0xff]
    %v278 = vld [vmem:[#allocation5 + $0x5d8] sm:$0xff]
    %v279 = vld [vmem:[#allocation5 + $0x5e0] sm:$0xff]
    %v280 = vld [vmem:[#allocation5 + $0x5e8] sm:$0xff]
    %v281 = vld [vmem:[#allocation5 + $0x5f0] sm:$0xff]
    %v282 = vld [vmem:[#allocation5 + $0x5f8] sm:$0xff]
    %v283 = vld [vmem:[#allocation5 + $0x600] sm:$0xff]
    %v284 = vld [vmem:[#allocation5 + $0x608] sm:$0xff]
    %v285 = vld [vmem:[#allocation5 + $0x610] sm:$0xff]
    %v286 = vld [vmem:[#allocation5 + $0x618] sm:$0xff]
    %v287 = vld [vmem:[#allocation5 + $0x620] sm:$0xff]
    %v288 = vld [vmem:[#allocation5 + $0x628] sm:$0xff]
    %v289 = vld [vmem:[#allocation5 + $0x630] sm:$0xff]
    %v290 = vld [vmem:[#allocation5 + $0x638] sm:$0xff]
    %v291 = vld [vmem:[#allocation5 + $0x640] sm:$0xff]
    %v292 = vld [vmem:[#allocation5 + $0x648] sm:$0xff]
    %v293 = vld [vmem:[#allocation5 + $0x650] sm:$0xff]
    %v294 = vld [vmem:[#allocation5 + $0x658] sm:$0xff]
    %v295 = vld [vmem:[#allocation5 + $0x660] sm:$0xff]
    %v296 = vld [vmem:[#allocation5 + $0x668] sm:$0xff]
    %v297 = vld [vmem:[#allocation5 + $0x670] sm:$0xff]
    %v298 = vld [vmem:[#allocation5 + $0x678] sm:$0xff]
    %v299 = vld [vmem:[#allocation5 + $0x680] sm:$0xff]
    %v300 = vld [vmem:[#allocation5 + $0x688] sm:$0xff]
    %v301 = vld [vmem:[#allocation5 + $0x690] sm:$0xff]
    %v302 = vld [vmem:[#allocation5 + $0x698] sm:$0xff]
    %v303 = vld [vmem:[#allocation5 + $0x6a0] sm:$0xff]
    %v304 = vld [vmem:[#allocation5 + $0x6a8] sm:$0xff]
    %v305 = vld [vmem:[#allocation5 + $0x6b0] sm:$0xff]
    %v306 = vld [vmem:[#allocation5 + $0x6b8] sm:$0xff]
    %v307 = vld [vmem:[#allocation5 + $0x6c0] sm:$0xff]
    %v308 = vld [vmem:[#allocation5 + $0x6c8] sm:$0xff]
    %v309 = vld [vmem:[#allocation5 + $0x6d0] sm:$0xff]
    %v310 = vld [vmem:[#allocation5 + $0x6d8] sm:$0xff]
    %v311 = vld [vmem:[#allocation5 + $0x6e0] sm:$0xff]
    %v312 = vld [vmem:[#allocation5 + $0x6e8] sm:$0xff]
    %v313 = vld [vmem:[#allocation5 + $0x6f0] sm:$0xff]
    %v314 = vld [vmem:[#allocation5 + $0x6f8] sm:$0xff]
    %v315 = vld [vmem:[#allocation5 + $0x700] sm:$0xff]
    %v316 = vld [vmem:[#allocation5 + $0x708] sm:$0xff]
    %v317 = vld [vmem:[#allocation5 + $0x710] sm:$0xff]
    %v318 = vld [vmem:[#allocation5 + $0x718] sm:$0xff]
    %v319 = vld [vmem:[#allocation5 + $0x720] sm:$0xff]
    %v320 = vld [vmem:[#allocation5 + $0x728] sm:$0xff]
    %v321 = vld [vmem:[#allocation5 + $0x730] sm:$0xff]
    %v322 = vld [vmem:[#allocation5 + $0x738] sm:$0xff]
    %v323 = vld [vmem:[#allocation5 + $0x740] sm:$0xff]
    %v324 = vld [vmem:[#allocation5 + $0x748] sm:$0xff]
    %v325 = vld [vmem:[#allocation5 + $0x750] sm:$0xff]
    %v326 = vld [vmem:[#allocation5 + $0x758] sm:$0xff]
    %v327 = vld [vmem:[#allocation5 + $0x760] sm:$0xff]
    %v328 = vld [vmem:[#allocation5 + $0x768] sm:$0xff]
    %v329 = vld [vmem:[#allocation5 + $0x770] sm:$0xff]
    %v330 = vld [vmem:[#allocation5 + $0x778] sm:$0xff]
    %v331 = vld [vmem:[#allocation5 + $0x780] sm:$0xff]
    %v332 = vld [vmem:[#allocation5 + $0x788] sm:$0xff]
    %v333 = vld [vmem:[#allocation5 + $0x790] sm:$0xff]
    %v334 = vld [vmem:[#allocation5 + $0x798] sm:$0xff]
    %v335 = vld [vmem:[#allocation5 + $0x7a0] sm:$0xff]
    %v336 = vld [vmem:[#allocation5 + $0x7a8] sm:$0xff]
    %v337 = vld [vmem:[#allocation5 + $0x7b0] sm:$0xff]
    %v338 = vld [vmem:[#allocation5 + $0x7b8] sm:$0xff]
    %v339 = vld [vmem:[#allocation5 + $0x7c0] sm:$0xff]
    %v340 = vld [vmem:[#allocation5 + $0x7c8] sm:$0xff]
    %v341 = vld [vmem:[#allocation5 + $0x7d0] sm:$0xff]
    %v342 = vld [vmem:[#allocation5 + $0x7d8] sm:$0xff]
    %v343 = vld [vmem:[#allocation5 + $0x7e0] sm:$0xff]
    %v344 = vld [vmem:[#allocation5 + $0x7e8] sm:$0xff]
    %v345 = vld [vmem:[#allocation5 + $0x7f0] sm:$0xff]
    %v346 = vld [vmem:[#allocation5 + $0x7f8] sm:$0xff]
    %v347 = vld [vmem:[#allocation7] sm:$0xf]
    %v349 = vperm.slane %v347, 0
    %v350 = vperm.slane %v347, 1
    %v351 = vperm.slane %v347, 2
    %v352 = vperm.slane %v347, 3
    %v361 = vunpack.c.l.b16 %v87
    %v362 = vunpack.c.h.b16 %v87
    %v363 = vunpack.c.l.b16 %v88
    %v364 = vunpack.c.h.b16 %v88
    %v365 = vunpack.c.l.b16 %v89
    %v366 = vunpack.c.h.b16 %v89
    %v367 = vunpack.c.l.b16 %v90
    %v368 = vunpack.c.h.b16 %v90
    %v369 = vpack.c.b16 %v361, %v361
    %v370 = vpack.c.b16 %v362, %v362
    %v371 = vpack.c.b16 %v363, %v363
    %v372 = vpack.c.b16 %v364, %v364
    %v373 = vpack.c.b16 %v365, %v365
    %v374 = vpack.c.b16 %v366, %v366
    %v375 = vpack.c.b16 %v367, %v367
    %v376 = vpack.c.b16 %v368, %v368
    %v641 = vunpack.c.l.b16 %v91
    %v642 = vunpack.c.h.b16 %v91
    %v643 = vunpack.c.l.b16 %v92
    %v644 = vunpack.c.h.b16 %v92
    %v645 = vunpack.c.l.b16 %v93
    %v646 = vunpack.c.h.b16 %v93
    %v647 = vunpack.c.l.b16 %v94
    %v648 = vunpack.c.h.b16 %v94
    %v649 = vunpack.c.l.b16 %v95
    %v650 = vunpack.c.h.b16 %v95
    %v651 = vunpack.c.l.b16 %v96
    %v652 = vunpack.c.h.b16 %v96
    %v653 = vunpack.c.l.b16 %v97
    %v654 = vunpack.c.h.b16 %v97
    %v655 = vunpack.c.l.b16 %v98
    %v656 = vunpack.c.h.b16 %v98
    %v657 = vunpack.c.l.b16 %v99
    %v658 = vunpack.c.h.b16 %v99
    %v659 = vunpack.c.l.b16 %v100
    %v660 = vunpack.c.h.b16 %v100
    %v661 = vunpack.c.l.b16 %v101
    %v662 = vunpack.c.h.b16 %v101
    %v663 = vunpack.c.l.b16 %v102
    %v664 = vunpack.c.h.b16 %v102
    %v665 = vunpack.c.l.b16 %v103
    %v666 = vunpack.c.h.b16 %v103
    %v667 = vunpack.c.l.b16 %v104
    %v668 = vunpack.c.h.b16 %v104
    %v669 = vunpack.c.l.b16 %v105
    %v670 = vunpack.c.h.b16 %v105
    %v671 = vunpack.c.l.b16 %v106
    %v672 = vunpack.c.h.b16 %v106
    %v673 = vunpack.c.l.b16 %v107
    %v674 = vunpack.c.h.b16 %v107
    %v675 = vunpack.c.l.b16 %v108
    %v676 = vunpack.c.h.b16 %v108
    %v677 = vunpack.c.l.b16 %v109
    %v678 = vunpack.c.h.b16 %v109
    %v679 = vunpack.c.l.b16 %v110
    %v680 = vunpack.c.h.b16 %v110
    %v681 = vunpack.c.l.b16 %v111
    %v682 = vunpack.c.h.b16 %v111
    %v683 = vunpack.c.l.b16 %v112
    %v684 = vunpack.c.h.b16 %v112
    %v685 = vunpack.c.l.b16 %v113
    %v686 = vunpack.c.h.b16 %v113
    %v687 = vunpack.c.l.b16 %v114
    %v688 = vunpack.c.h.b16 %v114
    %v689 = vunpack.c.l.b16 %v115
    %v690 = vunpack.c.h.b16 %v115
    %v691 = vunpack.c.l.b16 %v116
    %v692 = vunpack.c.h.b16 %v116
    %v693 = vunpack.c.l.b16 %v117
    %v694 = vunpack.c.h.b16 %v117
    %v695 = vunpack.c.l.b16 %v118
    %v696 = vunpack.c.h.b16 %v118
    %v697 = vunpack.c.l.b16 %v119
    %v698 = vunpack.c.h.b16 %v119
    %v699 = vunpack.c.l.b16 %v120
    %v700 = vunpack.c.h.b16 %v120
    %v701 = vunpack.c.l.b16 %v121
    %v702 = vunpack.c.h.b16 %v121
    %v703 = vunpack.c.l.b16 %v122
    %v704 = vunpack.c.h.b16 %v122
    %v705 = vunpack.c.l.b16 %v123
    %v706 = vunpack.c.h.b16 %v123
    %v707 = vunpack.c.l.b16 %v124
    %v708 = vunpack.c.h.b16 %v124
    %v709 = vunpack.c.l.b16 %v125
    %v710 = vunpack.c.h.b16 %v125
    %v711 = vunpack.c.l.b16 %v126
    %v712 = vunpack.c.h.b16 %v126
    %v713 = vunpack.c.l.b16 %v127
    %v714 = vunpack.c.h.b16 %v127
    %v715 = vunpack.c.l.b16 %v128
    %v716 = vunpack.c.h.b16 %v128
    %v717 = vunpack.c.l.b16 %v129
    %v718 = vunpack.c.h.b16 %v129
    %v719 = vunpack.c.l.b16 %v130
    %v720 = vunpack.c.h.b16 %v130
    %v721 = vunpack.c.l.b16 %v131
    %v722 = vunpack.c.h.b16 %v131
    %v723 = vunpack.c.l.b16 %v132
    %v724 = vunpack.c.h.b16 %v132
    %v725 = vunpack.c.l.b16 %v133
    %v726 = vunpack.c.h.b16 %v133
    %v727 = vunpack.c.l.b16 %v134
    %v728 = vunpack.c.h.b16 %v134
    %v729 = vunpack.c.l.b16 %v135
    %v730 = vunpack.c.h.b16 %v135
    %v731 = vunpack.c.l.b16 %v136
    %v732 = vunpack.c.h.b16 %v136
    %v733 = vunpack.c.l.b16 %v137
    %v734 = vunpack.c.h.b16 %v137
    %v735 = vunpack.c.l.b16 %v138
    %v736 = vunpack.c.h.b16 %v138
    %v737 = vunpack.c.l.b16 %v139
    %v738 = vunpack.c.h.b16 %v139
    %v739 = vunpack.c.l.b16 %v140
    %v740 = vunpack.c.h.b16 %v140
    %v741 = vunpack.c.l.b16 %v141
    %v742 = vunpack.c.h.b16 %v141
    %v743 = vunpack.c.l.b16 %v142
    %v744 = vunpack.c.h.b16 %v142
    %v745 = vunpack.c.l.b16 %v143
    %v746 = vunpack.c.h.b16 %v143
    %v747 = vunpack.c.l.b16 %v144
    %v748 = vunpack.c.h.b16 %v144
    %v749 = vunpack.c.l.b16 %v145
    %v750 = vunpack.c.h.b16 %v145
    %v751 = vunpack.c.l.b16 %v146
    %v752 = vunpack.c.h.b16 %v146
    %v753 = vunpack.c.l.b16 %v147
    %v754 = vunpack.c.h.b16 %v147
    %v755 = vunpack.c.l.b16 %v148
    %v756 = vunpack.c.h.b16 %v148
    %v757 = vunpack.c.l.b16 %v149
    %v758 = vunpack.c.h.b16 %v149
    %v759 = vunpack.c.l.b16 %v150
    %v760 = vunpack.c.h.b16 %v150
    %v761 = vunpack.c.l.b16 %v151
    %v762 = vunpack.c.h.b16 %v151
    %v763 = vunpack.c.l.b16 %v152
    %v764 = vunpack.c.h.b16 %v152
    %v765 = vunpack.c.l.b16 %v153
    %v766 = vunpack.c.h.b16 %v153
    %v767 = vunpack.c.l.b16 %v154
    %v768 = vunpack.c.h.b16 %v154
    %v769 = vunpack.c.l.b16 %v155
    %v770 = vunpack.c.h.b16 %v155
    %v771 = vunpack.c.l.b16 %v156
    %v772 = vunpack.c.h.b16 %v156
    %v773 = vunpack.c.l.b16 %v157
    %v774 = vunpack.c.h.b16 %v157
    %v775 = vunpack.c.l.b16 %v158
    %v776 = vunpack.c.h.b16 %v158
    %v777 = vunpack.c.l.b16 %v159
    %v778 = vunpack.c.h.b16 %v159
    %v779 = vunpack.c.l.b16 %v160
    %v780 = vunpack.c.h.b16 %v160
    %v781 = vunpack.c.l.b16 %v161
    %v782 = vunpack.c.h.b16 %v161
    %v783 = vunpack.c.l.b16 %v162
    %v784 = vunpack.c.h.b16 %v162
    %v785 = vunpack.c.l.b16 %v163
    %v786 = vunpack.c.h.b16 %v163
    %v787 = vunpack.c.l.b16 %v164
    %v788 = vunpack.c.h.b16 %v164
    %v789 = vunpack.c.l.b16 %v165
    %v790 = vunpack.c.h.b16 %v165
    %v791 = vunpack.c.l.b16 %v166
    %v792 = vunpack.c.h.b16 %v166
    %v793 = vunpack.c.l.b16 %v167
    %v794 = vunpack.c.h.b16 %v167
    %v795 = vunpack.c.l.b16 %v168
    %v796 = vunpack.c.h.b16 %v168
    %v797 = vunpack.c.l.b16 %v169
    %v798 = vunpack.c.h.b16 %v169
    %v799 = vunpack.c.l.b16 %v170
    %v800 = vunpack.c.h.b16 %v170
    %v801 = vunpack.c.l.b16 %v171
    %v802 = vunpack.c.h.b16 %v171
    %v803 = vunpack.c.l.b16 %v172
    %v804 = vunpack.c.h.b16 %v172
    %v805 = vunpack.c.l.b16 %v173
    %v806 = vunpack.c.h.b16 %v173
    %v807 = vunpack.c.l.b16 %v174
    %v808 = vunpack.c.h.b16 %v174
    %v809 = vunpack.c.l.b16 %v175
    %v810 = vunpack.c.h.b16 %v175
    %v811 = vunpack.c.l.b16 %v176
    %v812 = vunpack.c.h.b16 %v176
    %v813 = vunpack.c.l.b16 %v177
    %v814 = vunpack.c.h.b16 %v177
    %v815 = vunpack.c.l.b16 %v178
    %v816 = vunpack.c.h.b16 %v178
    %v817 = vunpack.c.l.b16 %v179
    %v818 = vunpack.c.h.b16 %v179
    %v819 = vunpack.c.l.b16 %v180
    %v820 = vunpack.c.h.b16 %v180
    %v821 = vunpack.c.l.b16 %v181
    %v822 = vunpack.c.h.b16 %v181
    %v823 = vunpack.c.l.b16 %v182
    %v824 = vunpack.c.h.b16 %v182
    %v825 = vunpack.c.l.b16 %v183
    %v826 = vunpack.c.h.b16 %v183
    %v827 = vunpack.c.l.b16 %v184
    %v828 = vunpack.c.h.b16 %v184
    %v829 = vunpack.c.l.b16 %v185
    %v830 = vunpack.c.h.b16 %v185
    %v831 = vunpack.c.l.b16 %v186
    %v832 = vunpack.c.h.b16 %v186
    %v833 = vunpack.c.l.b16 %v187
    %v834 = vunpack.c.h.b16 %v187
    %v835 = vunpack.c.l.b16 %v188
    %v836 = vunpack.c.h.b16 %v188
    %v837 = vunpack.c.l.b16 %v189
    %v838 = vunpack.c.h.b16 %v189
    %v839 = vunpack.c.l.b16 %v190
    %v840 = vunpack.c.h.b16 %v190
    %v841 = vunpack.c.l.b16 %v191
    %v842 = vunpack.c.h.b16 %v191
    %v843 = vunpack.c.l.b16 %v192
    %v844 = vunpack.c.h.b16 %v192
    %v845 = vunpack.c.l.b16 %v193
    %v846 = vunpack.c.h.b16 %v193
    %v847 = vunpack.c.l.b16 %v194
    %v848 = vunpack.c.h.b16 %v194
    %v849 = vunpack.c.l.b16 %v195
    %v850 = vunpack.c.h.b16 %v195
    %v851 = vunpack.c.l.b16 %v196
    %v852 = vunpack.c.h.b16 %v196
    %v853 = vunpack.c.l.b16 %v197
    %v854 = vunpack.c.h.b16 %v197
    %v855 = vunpack.c.l.b16 %v198
    %v856 = vunpack.c.h.b16 %v198
    %v857 = vunpack.c.l.b16 %v199
    %v858 = vunpack.c.h.b16 %v199
    %v859 = vunpack.c.l.b16 %v200
    %v860 = vunpack.c.h.b16 %v200
    %v861 = vunpack.c.l.b16 %v201
    %v862 = vunpack.c.h.b16 %v201
    %v863 = vunpack.c.l.b16 %v202
    %v864 = vunpack.c.h.b16 %v202
    %v865 = vunpack.c.l.b16 %v203
    %v866 = vunpack.c.h.b16 %v203
    %v867 = vunpack.c.l.b16 %v204
    %v868 = vunpack.c.h.b16 %v204
    %v869 = vunpack.c.l.b16 %v205
    %v870 = vunpack.c.h.b16 %v205
    %v871 = vunpack.c.l.b16 %v206
    %v872 = vunpack.c.h.b16 %v206
    %v873 = vunpack.c.l.b16 %v207
    %v874 = vunpack.c.h.b16 %v207
    %v875 = vunpack.c.l.b16 %v208
    %v876 = vunpack.c.h.b16 %v208
    %v877 = vunpack.c.l.b16 %v209
    %v878 = vunpack.c.h.b16 %v209
    %v879 = vunpack.c.l.b16 %v210
    %v880 = vunpack.c.h.b16 %v210
    %v881 = vunpack.c.l.b16 %v211
    %v882 = vunpack.c.h.b16 %v211
    %v883 = vunpack.c.l.b16 %v212
    %v884 = vunpack.c.h.b16 %v212
    %v885 = vunpack.c.l.b16 %v213
    %v886 = vunpack.c.h.b16 %v213
    %v887 = vunpack.c.l.b16 %v214
    %v888 = vunpack.c.h.b16 %v214
    %v889 = vunpack.c.l.b16 %v215
    %v890 = vunpack.c.h.b16 %v215
    %v891 = vunpack.c.l.b16 %v216
    %v892 = vunpack.c.h.b16 %v216
    %v893 = vunpack.c.l.b16 %v217
    %v894 = vunpack.c.h.b16 %v217
    %v895 = vunpack.c.l.b16 %v218
    %v896 = vunpack.c.h.b16 %v218
    %v897 = vunpack.c.l.b16 %v219
    %v898 = vunpack.c.h.b16 %v219
    %v899 = vunpack.c.l.b16 %v220
    %v900 = vunpack.c.h.b16 %v220
    %v901 = vunpack.c.l.b16 %v221
    %v902 = vunpack.c.h.b16 %v221
    %v903 = vunpack.c.l.b16 %v222
    %v904 = vunpack.c.h.b16 %v222
    %v905 = vunpack.c.l.b16 %v223
    %v906 = vunpack.c.h.b16 %v223
    %v907 = vunpack.c.l.b16 %v224
    %v908 = vunpack.c.h.b16 %v224
    %v909 = vunpack.c.l.b16 %v225
    %v910 = vunpack.c.h.b16 %v225
    %v911 = vunpack.c.l.b16 %v226
    %v912 = vunpack.c.h.b16 %v226
    %v913 = vunpack.c.l.b16 %v227
    %v914 = vunpack.c.h.b16 %v227
    %v915 = vunpack.c.l.b16 %v228
    %v916 = vunpack.c.h.b16 %v228
    %v917 = vunpack.c.l.b16 %v229
    %v918 = vunpack.c.h.b16 %v229
    %v919 = vunpack.c.l.b16 %v230
    %v920 = vunpack.c.h.b16 %v230
    %v921 = vunpack.c.l.b16 %v231
    %v922 = vunpack.c.h.b16 %v231
    %v923 = vunpack.c.l.b16 %v232
    %v924 = vunpack.c.h.b16 %v232
    %v925 = vunpack.c.l.b16 %v233
    %v926 = vunpack.c.h.b16 %v233
    %v927 = vunpack.c.l.b16 %v234
    %v928 = vunpack.c.h.b16 %v234
    %v929 = vunpack.c.l.b16 %v235
    %v930 = vunpack.c.h.b16 %v235
    %v931 = vunpack.c.l.b16 %v236
    %v932 = vunpack.c.h.b16 %v236
    %v933 = vunpack.c.l.b16 %v237
    %v934 = vunpack.c.h.b16 %v237
    %v935 = vunpack.c.l.b16 %v238
    %v936 = vunpack.c.h.b16 %v238
    %v937 = vunpack.c.l.b16 %v239
    %v938 = vunpack.c.h.b16 %v239
    %v939 = vunpack.c.l.b16 %v240
    %v940 = vunpack.c.h.b16 %v240
    %v941 = vunpack.c.l.b16 %v241
    %v942 = vunpack.c.h.b16 %v241
    %v943 = vunpack.c.l.b16 %v242
    %v944 = vunpack.c.h.b16 %v242
    %v945 = vunpack.c.l.b16 %v243
    %v946 = vunpack.c.h.b16 %v243
    %v947 = vunpack.c.l.b16 %v244
    %v948 = vunpack.c.h.b16 %v244
    %v949 = vunpack.c.l.b16 %v245
    %v950 = vunpack.c.h.b16 %v245
    %v951 = vunpack.c.l.b16 %v246
    %v952 = vunpack.c.h.b16 %v246
    %v953 = vunpack.c.l.b16 %v247
    %v954 = vunpack.c.h.b16 %v247
    %v955 = vunpack.c.l.b16 %v248
    %v956 = vunpack.c.h.b16 %v248
    %v957 = vunpack.c.l.b16 %v249
    %v958 = vunpack.c.h.b16 %v249
    %v959 = vunpack.c.l.b16 %v250
    %v960 = vunpack.c.h.b16 %v250
    %v961 = vunpack.c.l.b16 %v251
    %v962 = vunpack.c.h.b16 %v251
    %v963 = vunpack.c.l.b16 %v252
    %v964 = vunpack.c.h.b16 %v252
    %v965 = vunpack.c.l.b16 %v253
    %v966 = vunpack.c.h.b16 %v253
    %v967 = vunpack.c.l.b16 %v254
    %v968 = vunpack.c.h.b16 %v254
    %v969 = vunpack.c.l.b16 %v255
    %v970 = vunpack.c.h.b16 %v255
    %v971 = vunpack.c.l.b16 %v256
    %v972 = vunpack.c.h.b16 %v256
    %v973 = vunpack.c.l.b16 %v257
    %v974 = vunpack.c.h.b16 %v257
    %v975 = vunpack.c.l.b16 %v258
    %v976 = vunpack.c.h.b16 %v258
    %v977 = vunpack.c.l.b16 %v259
    %v978 = vunpack.c.h.b16 %v259
    %v979 = vunpack.c.l.b16 %v260
    %v980 = vunpack.c.h.b16 %v260
    %v981 = vunpack.c.l.b16 %v261
    %v982 = vunpack.c.h.b16 %v261
    %v983 = vunpack.c.l.b16 %v262
    %v984 = vunpack.c.h.b16 %v262
    %v985 = vunpack.c.l.b16 %v263
    %v986 = vunpack.c.h.b16 %v263
    %v987 = vunpack.c.l.b16 %v264
    %v988 = vunpack.c.h.b16 %v264
    %v989 = vunpack.c.l.b16 %v265
    %v990 = vunpack.c.h.b16 %v265
    %v991 = vunpack.c.l.b16 %v266
    %v992 = vunpack.c.h.b16 %v266
    %v993 = vunpack.c.l.b16 %v267
    %v994 = vunpack.c.h.b16 %v267
    %v995 = vunpack.c.l.b16 %v268
    %v996 = vunpack.c.h.b16 %v268
    %v997 = vunpack.c.l.b16 %v269
    %v998 = vunpack.c.h.b16 %v269
    %v999 = vunpack.c.l.b16 %v270
    %v1000 = vunpack.c.h.b16 %v270
    %v1001 = vunpack.c.l.b16 %v271
    %v1002 = vunpack.c.h.b16 %v271
    %v1003 = vunpack.c.l.b16 %v272
    %v1004 = vunpack.c.h.b16 %v272
    %v1005 = vunpack.c.l.b16 %v273
    %v1006 = vunpack.c.h.b16 %v273
    %v1007 = vunpack.c.l.b16 %v274
    %v1008 = vunpack.c.h.b16 %v274
    %v1009 = vunpack.c.l.b16 %v275
    %v1010 = vunpack.c.h.b16 %v275
    %v1011 = vunpack.c.l.b16 %v276
    %v1012 = vunpack.c.h.b16 %v276
    %v1013 = vunpack.c.l.b16 %v277
    %v1014 = vunpack.c.h.b16 %v277
    %v1015 = vunpack.c.l.b16 %v278
    %v1016 = vunpack.c.h.b16 %v278
    %v1017 = vunpack.c.l.b16 %v279
    %v1018 = vunpack.c.h.b16 %v279
    %v1019 = vunpack.c.l.b16 %v280
    %v1020 = vunpack.c.h.b16 %v280
    %v1021 = vunpack.c.l.b16 %v281
    %v1022 = vunpack.c.h.b16 %v281
    %v1023 = vunpack.c.l.b16 %v282
    %v1024 = vunpack.c.h.b16 %v282
    %v1025 = vunpack.c.l.b16 %v283
    %v1026 = vunpack.c.h.b16 %v283
    %v1027 = vunpack.c.l.b16 %v284
    %v1028 = vunpack.c.h.b16 %v284
    %v1029 = vunpack.c.l.b16 %v285
    %v1030 = vunpack.c.h.b16 %v285
    %v1031 = vunpack.c.l.b16 %v286
    %v1032 = vunpack.c.h.b16 %v286
    %v1033 = vunpack.c.l.b16 %v287
    %v1034 = vunpack.c.h.b16 %v287
    %v1035 = vunpack.c.l.b16 %v288
    %v1036 = vunpack.c.h.b16 %v288
    %v1037 = vunpack.c.l.b16 %v289
    %v1038 = vunpack.c.h.b16 %v289
    %v1039 = vunpack.c.l.b16 %v290
    %v1040 = vunpack.c.h.b16 %v290
    %v1041 = vunpack.c.l.b16 %v291
    %v1042 = vunpack.c.h.b16 %v291
    %v1043 = vunpack.c.l.b16 %v292
    %v1044 = vunpack.c.h.b16 %v292
    %v1045 = vunpack.c.l.b16 %v293
    %v1046 = vunpack.c.h.b16 %v293
    %v1047 = vunpack.c.l.b16 %v294
    %v1048 = vunpack.c.h.b16 %v294
    %v1049 = vunpack.c.l.b16 %v295
    %v1050 = vunpack.c.h.b16 %v295
    %v1051 = vunpack.c.l.b16 %v296
    %v1052 = vunpack.c.h.b16 %v296
    %v1053 = vunpack.c.l.b16 %v297
    %v1054 = vunpack.c.h.b16 %v297
    %v1055 = vunpack.c.l.b16 %v298
    %v1056 = vunpack.c.h.b16 %v298
    %v1057 = vunpack.c.l.b16 %v299
    %v1058 = vunpack.c.h.b16 %v299
    %v1059 = vunpack.c.l.b16 %v300
    %v1060 = vunpack.c.h.b16 %v300
    %v1061 = vunpack.c.l.b16 %v301
    %v1062 = vunpack.c.h.b16 %v301
    %v1063 = vunpack.c.l.b16 %v302
    %v1064 = vunpack.c.h.b16 %v302
    %v1065 = vunpack.c.l.b16 %v303
    %v1066 = vunpack.c.h.b16 %v303
    %v1067 = vunpack.c.l.b16 %v304
    %v1068 = vunpack.c.h.b16 %v304
    %v1069 = vunpack.c.l.b16 %v305
    %v1070 = vunpack.c.h.b16 %v305
    %v1071 = vunpack.c.l.b16 %v306
    %v1072 = vunpack.c.h.b16 %v306
    %v1073 = vunpack.c.l.b16 %v307
    %v1074 = vunpack.c.h.b16 %v307
    %v1075 = vunpack.c.l.b16 %v308
    %v1076 = vunpack.c.h.b16 %v308
    %v1077 = vunpack.c.l.b16 %v309
    %v1078 = vunpack.c.h.b16 %v309
    %v1079 = vunpack.c.l.b16 %v310
    %v1080 = vunpack.c.h.b16 %v310
    %v1081 = vunpack.c.l.b16 %v311
    %v1082 = vunpack.c.h.b16 %v311
    %v1083 = vunpack.c.l.b16 %v312
    %v1084 = vunpack.c.h.b16 %v312
    %v1085 = vunpack.c.l.b16 %v313
    %v1086 = vunpack.c.h.b16 %v313
    %v1087 = vunpack.c.l.b16 %v314
    %v1088 = vunpack.c.h.b16 %v314
    %v1089 = vunpack.c.l.b16 %v315
    %v1090 = vunpack.c.h.b16 %v315
    %v1091 = vunpack.c.l.b16 %v316
    %v1092 = vunpack.c.h.b16 %v316
    %v1093 = vunpack.c.l.b16 %v317
    %v1094 = vunpack.c.h.b16 %v317
    %v1095 = vunpack.c.l.b16 %v318
    %v1096 = vunpack.c.h.b16 %v318
    %v1097 = vunpack.c.l.b16 %v319
    %v1098 = vunpack.c.h.b16 %v319
    %v1099 = vunpack.c.l.b16 %v320
    %v1100 = vunpack.c.h.b16 %v320
    %v1101 = vunpack.c.l.b16 %v321
    %v1102 = vunpack.c.h.b16 %v321
    %v1103 = vunpack.c.l.b16 %v322
    %v1104 = vunpack.c.h.b16 %v322
    %v1105 = vunpack.c.l.b16 %v323
    %v1106 = vunpack.c.h.b16 %v323
    %v1107 = vunpack.c.l.b16 %v324
    %v1108 = vunpack.c.h.b16 %v324
    %v1109 = vunpack.c.l.b16 %v325
    %v1110 = vunpack.c.h.b16 %v325
    %v1111 = vunpack.c.l.b16 %v326
    %v1112 = vunpack.c.h.b16 %v326
    %v1113 = vunpack.c.l.b16 %v327
    %v1114 = vunpack.c.h.b16 %v327
    %v1115 = vunpack.c.l.b16 %v328
    %v1116 = vunpack.c.h.b16 %v328
    %v1117 = vunpack.c.l.b16 %v329
    %v1118 = vunpack.c.h.b16 %v329
    %v1119 = vunpack.c.l.b16 %v330
    %v1120 = vunpack.c.h.b16 %v330
    %v1121 = vunpack.c.l.b16 %v331
    %v1122 = vunpack.c.h.b16 %v331
    %v1123 = vunpack.c.l.b16 %v332
    %v1124 = vunpack.c.h.b16 %v332
    %v1125 = vunpack.c.l.b16 %v333
    %v1126 = vunpack.c.h.b16 %v333
    %v1127 = vunpack.c.l.b16 %v334
    %v1128 = vunpack.c.h.b16 %v334
    %v1129 = vunpack.c.l.b16 %v335
    %v1130 = vunpack.c.h.b16 %v335
    %v1131 = vunpack.c.l.b16 %v336
    %v1132 = vunpack.c.h.b16 %v336
    %v1133 = vunpack.c.l.b16 %v337
    %v1134 = vunpack.c.h.b16 %v337
    %v1135 = vunpack.c.l.b16 %v338
    %v1136 = vunpack.c.h.b16 %v338
    %v1137 = vunpack.c.l.b16 %v339
    %v1138 = vunpack.c.h.b16 %v339
    %v1139 = vunpack.c.l.b16 %v340
    %v1140 = vunpack.c.h.b16 %v340
    %v1141 = vunpack.c.l.b16 %v341
    %v1142 = vunpack.c.h.b16 %v341
    %v1143 = vunpack.c.l.b16 %v342
    %v1144 = vunpack.c.h.b16 %v342
    %v1145 = vunpack.c.l.b16 %v343
    %v1146 = vunpack.c.h.b16 %v343
    %v1147 = vunpack.c.l.b16 %v344
    %v1148 = vunpack.c.h.b16 %v344
    %v1149 = vunpack.c.l.b16 %v345
    %v1150 = vunpack.c.h.b16 %v345
    %v1151 = vunpack.c.l.b16 %v346
    %v1152 = vunpack.c.h.b16 %v346
    %v1153 = vpack.c.b16 %v645, %v641
    %v1154 = vpack.c.b16 %v646, %v642
    %v1155 = vpack.c.b16 %v647, %v643
    %v1156 = vpack.c.b16 %v648, %v644
    %v1157 = vpack.c.b16 %v653, %v649
    %v1158 = vpack.c.b16 %v654, %v650
    %v1159 = vpack.c.b16 %v655, %v651
    %v1160 = vpack.c.b16 %v656, %v652
    %v1161 = vpack.c.b16 %v661, %v657
    %v1162 = vpack.c.b16 %v662, %v658
    %v1163 = vpack.c.b16 %v663, %v659
    %v1164 = vpack.c.b16 %v664, %v660
    %v1165 = vpack.c.b16 %v669, %v665
    %v1166 = vpack.c.b16 %v670, %v666
    %v1167 = vpack.c.b16 %v671, %v667
    %v1168 = vpack.c.b16 %v672, %v668
    %v1169 = vpack.c.b16 %v677, %v673
    %v1170 = vpack.c.b16 %v678, %v674
    %v1171 = vpack.c.b16 %v679, %v675
    %v1172 = vpack.c.b16 %v680, %v676
    %v1173 = vpack.c.b16 %v685, %v681
    %v1174 = vpack.c.b16 %v686, %v682
    %v1175 = vpack.c.b16 %v687, %v683
    %v1176 = vpack.c.b16 %v688, %v684
    %v1177 = vpack.c.b16 %v693, %v689
    %v1178 = vpack.c.b16 %v694, %v690
    %v1179 = vpack.c.b16 %v695, %v691
    %v1180 = vpack.c.b16 %v696, %v692
    %v1181 = vpack.c.b16 %v701, %v697
    %v1182 = vpack.c.b16 %v702, %v698
    %v1183 = vpack.c.b16 %v703, %v699
    %v1184 = vpack.c.b16 %v704, %v700
    %v1185 = vpack.c.b16 %v709, %v705
    %v1186 = vpack.c.b16 %v710, %v706
    %v1187 = vpack.c.b16 %v711, %v707
    %v1188 = vpack.c.b16 %v712, %v708
    %v1189 = vpack.c.b16 %v717, %v713
    %v1190 = vpack.c.b16 %v718, %v714
    %v1191 = vpack.c.b16 %v719, %v715
    %v1192 = vpack.c.b16 %v720, %v716
    %v1193 = vpack.c.b16 %v725, %v721
    %v1194 = vpack.c.b16 %v726, %v722
    %v1195 = vpack.c.b16 %v727, %v723
    %v1196 = vpack.c.b16 %v728, %v724
    %v1197 = vpack.c.b16 %v733, %v729
    %v1198 = vpack.c.b16 %v734, %v730
    %v1199 = vpack.c.b16 %v735, %v731
    %v1200 = vpack.c.b16 %v736, %v732
    %v1201 = vpack.c.b16 %v741, %v737
    %v1202 = vpack.c.b16 %v742, %v738
    %v1203 = vpack.c.b16 %v743, %v739
    %v1204 = vpack.c.b16 %v744, %v740
    %v1205 = vpack.c.b16 %v749, %v745
    %v1206 = vpack.c.b16 %v750, %v746
    %v1207 = vpack.c.b16 %v751, %v747
    %v1208 = vpack.c.b16 %v752, %v748
    %v1209 = vpack.c.b16 %v757, %v753
    %v1210 = vpack.c.b16 %v758, %v754
    %v1211 = vpack.c.b16 %v759, %v755
    %v1212 = vpack.c.b16 %v760, %v756
    %v1213 = vpack.c.b16 %v765, %v761
    %v1214 = vpack.c.b16 %v766, %v762
    %v1215 = vpack.c.b16 %v767, %v763
    %v1216 = vpack.c.b16 %v768, %v764
    %v1217 = vpack.c.b16 %v773, %v769
    %v1218 = vpack.c.b16 %v774, %v770
    %v1219 = vpack.c.b16 %v775, %v771
    %v1220 = vpack.c.b16 %v776, %v772
    %v1221 = vpack.c.b16 %v781, %v777
    %v1222 = vpack.c.b16 %v782, %v778
    %v1223 = vpack.c.b16 %v783, %v779
    %v1224 = vpack.c.b16 %v784, %v780
    %v1225 = vpack.c.b16 %v789, %v785
    %v1226 = vpack.c.b16 %v790, %v786
    %v1227 = vpack.c.b16 %v791, %v787
    %v1228 = vpack.c.b16 %v792, %v788
    %v1229 = vpack.c.b16 %v797, %v793
    %v1230 = vpack.c.b16 %v798, %v794
    %v1231 = vpack.c.b16 %v799, %v795
    %v1232 = vpack.c.b16 %v800, %v796
    %v1233 = vpack.c.b16 %v805, %v801
    %v1234 = vpack.c.b16 %v806, %v802
    %v1235 = vpack.c.b16 %v807, %v803
    %v1236 = vpack.c.b16 %v808, %v804
    %v1237 = vpack.c.b16 %v813, %v809
    %v1238 = vpack.c.b16 %v814, %v810
    %v1239 = vpack.c.b16 %v815, %v811
    %v1240 = vpack.c.b16 %v816, %v812
    %v1241 = vpack.c.b16 %v821, %v817
    %v1242 = vpack.c.b16 %v822, %v818
    %v1243 = vpack.c.b16 %v823, %v819
    %v1244 = vpack.c.b16 %v824, %v820
    %v1245 = vpack.c.b16 %v829, %v825
    %v1246 = vpack.c.b16 %v830, %v826
    %v1247 = vpack.c.b16 %v831, %v827
    %v1248 = vpack.c.b16 %v832, %v828
    %v1249 = vpack.c.b16 %v837, %v833
    %v1250 = vpack.c.b16 %v838, %v834
    %v1251 = vpack.c.b16 %v839, %v835
    %v1252 = vpack.c.b16 %v840, %v836
    %v1253 = vpack.c.b16 %v845, %v841
    %v1254 = vpack.c.b16 %v846, %v842
    %v1255 = vpack.c.b16 %v847, %v843
    %v1256 = vpack.c.b16 %v848, %v844
    %v1257 = vpack.c.b16 %v853, %v849
    %v1258 = vpack.c.b16 %v854, %v850
    %v1259 = vpack.c.b16 %v855, %v851
    %v1260 = vpack.c.b16 %v856, %v852
    %v1261 = vpack.c.b16 %v861, %v857
    %v1262 = vpack.c.b16 %v862, %v858
    %v1263 = vpack.c.b16 %v863, %v859
    %v1264 = vpack.c.b16 %v864, %v860
    %v1265 = vpack.c.b16 %v869, %v865
    %v1266 = vpack.c.b16 %v870, %v866
    %v1267 = vpack.c.b16 %v871, %v867
    %v1268 = vpack.c.b16 %v872, %v868
    %v1269 = vpack.c.b16 %v877, %v873
    %v1270 = vpack.c.b16 %v878, %v874
    %v1271 = vpack.c.b16 %v879, %v875
    %v1272 = vpack.c.b16 %v880, %v876
    %v1273 = vpack.c.b16 %v885, %v881
    %v1274 = vpack.c.b16 %v886, %v882
    %v1275 = vpack.c.b16 %v887, %v883
    %v1276 = vpack.c.b16 %v888, %v884
    %v1277 = vpack.c.b16 %v893, %v889
    %v1278 = vpack.c.b16 %v894, %v890
    %v1279 = vpack.c.b16 %v895, %v891
    %v1280 = vpack.c.b16 %v896, %v892
    %v1281 = vpack.c.b16 %v901, %v897
    %v1282 = vpack.c.b16 %v902, %v898
    %v1283 = vpack.c.b16 %v903, %v899
    %v1284 = vpack.c.b16 %v904, %v900
    %v1285 = vpack.c.b16 %v909, %v905
    %v1286 = vpack.c.b16 %v910, %v906
    %v1287 = vpack.c.b16 %v911, %v907
    %v1288 = vpack.c.b16 %v912, %v908
    %v1289 = vpack.c.b16 %v917, %v913
    %v1290 = vpack.c.b16 %v918, %v914
    %v1291 = vpack.c.b16 %v919, %v915
    %v1292 = vpack.c.b16 %v920, %v916
    %v1293 = vpack.c.b16 %v925, %v921
    %v1294 = vpack.c.b16 %v926, %v922
    %v1295 = vpack.c.b16 %v927, %v923
    %v1296 = vpack.c.b16 %v928, %v924
    %v1297 = vpack.c.b16 %v933, %v929
    %v1298 = vpack.c.b16 %v934, %v930
    %v1299 = vpack.c.b16 %v935, %v931
    %v1300 = vpack.c.b16 %v936, %v932
    %v1301 = vpack.c.b16 %v941, %v937
    %v1302 = vpack.c.b16 %v942, %v938
    %v1303 = vpack.c.b16 %v943, %v939
    %v1304 = vpack.c.b16 %v944, %v940
    %v1305 = vpack.c.b16 %v949, %v945
    %v1306 = vpack.c.b16 %v950, %v946
    %v1307 = vpack.c.b16 %v951, %v947
    %v1308 = vpack.c.b16 %v952, %v948
    %v1309 = vpack.c.b16 %v957, %v953
    %v1310 = vpack.c.b16 %v958, %v954
    %v1311 = vpack.c.b16 %v959, %v955
    %v1312 = vpack.c.b16 %v960, %v956
    %v1313 = vpack.c.b16 %v965, %v961
    %v1314 = vpack.c.b16 %v966, %v962
    %v1315 = vpack.c.b16 %v967, %v963
    %v1316 = vpack.c.b16 %v968, %v964
    %v1317 = vpack.c.b16 %v973, %v969
    %v1318 = vpack.c.b16 %v974, %v970
    %v1319 = vpack.c.b16 %v975, %v971
    %v1320 = vpack.c.b16 %v976, %v972
    %v1321 = vpack.c.b16 %v981, %v977
    %v1322 = vpack.c.b16 %v982, %v978
    %v1323 = vpack.c.b16 %v983, %v979
    %v1324 = vpack.c.b16 %v984, %v980
    %v1325 = vpack.c.b16 %v989, %v985
    %v1326 = vpack.c.b16 %v990, %v986
    %v1327 = vpack.c.b16 %v991, %v987
    %v1328 = vpack.c.b16 %v992, %v988
    %v1329 = vpack.c.b16 %v997, %v993
    %v1330 = vpack.c.b16 %v998, %v994
    %v1331 = vpack.c.b16 %v999, %v995
    %v1332 = vpack.c.b16 %v1000, %v996
    %v1333 = vpack.c.b16 %v1005, %v1001
    %v1334 = vpack.c.b16 %v1006, %v1002
    %v1335 = vpack.c.b16 %v1007, %v1003
    %v1336 = vpack.c.b16 %v1008, %v1004
    %v1337 = vpack.c.b16 %v1013, %v1009
    %v1338 = vpack.c.b16 %v1014, %v1010
    %v1339 = vpack.c.b16 %v1015, %v1011
    %v1340 = vpack.c.b16 %v1016, %v1012
    %v1341 = vpack.c.b16 %v1021, %v1017
    %v1342 = vpack.c.b16 %v1022, %v1018
    %v1343 = vpack.c.b16 %v1023, %v1019
    %v1344 = vpack.c.b16 %v1024, %v1020
    %v1345 = vpack.c.b16 %v1029, %v1025
    %v1346 = vpack.c.b16 %v1030, %v1026
    %v1347 = vpack.c.b16 %v1031, %v1027
    %v1348 = vpack.c.b16 %v1032, %v1028
    %v1349 = vpack.c.b16 %v1037, %v1033
    %v1350 = vpack.c.b16 %v1038, %v1034
    %v1351 = vpack.c.b16 %v1039, %v1035
    %v1352 = vpack.c.b16 %v1040, %v1036
    %v1353 = vpack.c.b16 %v1045, %v1041
    %v1354 = vpack.c.b16 %v1046, %v1042
    %v1355 = vpack.c.b16 %v1047, %v1043
    %v1356 = vpack.c.b16 %v1048, %v1044
    %v1357 = vpack.c.b16 %v1053, %v1049
    %v1358 = vpack.c.b16 %v1054, %v1050
    %v1359 = vpack.c.b16 %v1055, %v1051
    %v1360 = vpack.c.b16 %v1056, %v1052
    %v1361 = vpack.c.b16 %v1061, %v1057
    %v1362 = vpack.c.b16 %v1062, %v1058
    %v1363 = vpack.c.b16 %v1063, %v1059
    %v1364 = vpack.c.b16 %v1064, %v1060
    %v1365 = vpack.c.b16 %v1069, %v1065
    %v1366 = vpack.c.b16 %v1070, %v1066
    %v1367 = vpack.c.b16 %v1071, %v1067
    %v1368 = vpack.c.b16 %v1072, %v1068
    %v1369 = vpack.c.b16 %v1077, %v1073
    %v1370 = vpack.c.b16 %v1078, %v1074
    %v1371 = vpack.c.b16 %v1079, %v1075
    %v1372 = vpack.c.b16 %v1080, %v1076
    %v1373 = vpack.c.b16 %v1085, %v1081
    %v1374 = vpack.c.b16 %v1086, %v1082
    %v1375 = vpack.c.b16 %v1087, %v1083
    %v1376 = vpack.c.b16 %v1088, %v1084
    %v1377 = vpack.c.b16 %v1093, %v1089
    %v1378 = vpack.c.b16 %v1094, %v1090
    %v1379 = vpack.c.b16 %v1095, %v1091
    %v1380 = vpack.c.b16 %v1096, %v1092
    %v1381 = vpack.c.b16 %v1101, %v1097
    %v1382 = vpack.c.b16 %v1102, %v1098
    %v1383 = vpack.c.b16 %v1103, %v1099
    %v1384 = vpack.c.b16 %v1104, %v1100
    %v1385 = vpack.c.b16 %v1109, %v1105
    %v1386 = vpack.c.b16 %v1110, %v1106
    %v1387 = vpack.c.b16 %v1111, %v1107
    %v1388 = vpack.c.b16 %v1112, %v1108
    %v1389 = vpack.c.b16 %v1117, %v1113
    %v1390 = vpack.c.b16 %v1118, %v1114
    %v1391 = vpack.c.b16 %v1119, %v1115
    %v1392 = vpack.c.b16 %v1120, %v1116
    %v1393 = vpack.c.b16 %v1125, %v1121
    %v1394 = vpack.c.b16 %v1126, %v1122
    %v1395 = vpack.c.b16 %v1127, %v1123
    %v1396 = vpack.c.b16 %v1128, %v1124
    %v1397 = vpack.c.b16 %v1133, %v1129
    %v1398 = vpack.c.b16 %v1134, %v1130
    %v1399 = vpack.c.b16 %v1135, %v1131
    %v1400 = vpack.c.b16 %v1136, %v1132
    %v1401 = vpack.c.b16 %v1141, %v1137
    %v1402 = vpack.c.b16 %v1142, %v1138
    %v1403 = vpack.c.b16 %v1143, %v1139
    %v1404 = vpack.c.b16 %v1144, %v1140
    %v1405 = vpack.c.b16 %v1149, %v1145
    %v1406 = vpack.c.b16 %v1150, %v1146
    %v1407 = vpack.c.b16 %v1151, %v1147
    %v1408 = vpack.c.b16 %v1152, %v1148
    %1665 = vmatpush.bf16.msra.mxu0 %v1181
    %1666 = vmatpush.bf16.msra.mxu0 %v1177
    %1667 = vmatpush.bf16.msra.mxu0 %v1173
    %1668 = vmatpush.bf16.msra.mxu0 %v1169
    %1669 = vmatpush.bf16.msra.mxu0 %v1165
    %1670 = vmatpush.bf16.msra.mxu0 %v1161
    %1671 = vmatpush.bf16.msra.mxu0 %v1157
    %1672 = vmatpush.bf16.msra.mxu0 %v1153
    %1673 = vmatmul.bf16.gmra.mxu0 %v369
    %v1674 = vpop.f32.mrf.mxu0
    %v1675 = vadd.f32 %v349, %v1674
    %v1676 = vpop.f32.mrf.mxu0
    %1677 = vdwg.mxu0
    %1678 = vmatpush.bf16.msra.mxu0 %v1213
    %1679 = vmatpush.bf16.msra.mxu0 %v1209
    %1680 = vmatpush.bf16.msra.mxu0 %v1205
    %1681 = vmatpush.bf16.msra.mxu0 %v1201
    %1682 = vmatpush.bf16.msra.mxu0 %v1197
    %1683 = vmatpush.bf16.msra.mxu0 %v1193
    %1684 = vmatpush.bf16.msra.mxu0 %v1189
    %1685 = vmatpush.bf16.msra.mxu0 %v1185
    %1686 = vmatmul.bf16.gmra.mxu0 %v370
    %v1687 = vpop.f32.mrf.mxu0
    %v1688 = vadd.f32 %v1675, %v1687
    %v1689 = vpop.f32.mrf.mxu0
    %1690 = vdwg.mxu0
    %1691 = vmatpush.bf16.msra.mxu0 %v1245
    %1692 = vmatpush.bf16.msra.mxu0 %v1241
    %1693 = vmatpush.bf16.msra.mxu0 %v1237
    %1694 = vmatpush.bf16.msra.mxu0 %v1233
    %1695 = vmatpush.bf16.msra.mxu0 %v1229
    %1696 = vmatpush.bf16.msra.mxu0 %v1225
    %1697 = vmatpush.bf16.msra.mxu0 %v1221
    %1698 = vmatpush.bf16.msra.mxu0 %v1217
    %1699 = vmatmul.bf16.gmra.mxu0 %v371
    %v1700 = vpop.f32.mrf.mxu0
    %v1701 = vadd.f32 %v1688, %v1700
    %v1702 = vpop.f32.mrf.mxu0
    %1703 = vdwg.mxu0
    %1704 = vmatpush.bf16.msra.mxu0 %v1277
    %1705 = vmatpush.bf16.msra.mxu0 %v1273
    %1706 = vmatpush.bf16.msra.mxu0 %v1269
    %1707 = vmatpush.bf16.msra.mxu0 %v1265
    %1708 = vmatpush.bf16.msra.mxu0 %v1261
    %1709 = vmatpush.bf16.msra.mxu0 %v1257
    %1710 = vmatpush.bf16.msra.mxu0 %v1253
    %1711 = vmatpush.bf16.msra.mxu0 %v1249
    %1712 = vmatmul.bf16.gmra.mxu0 %v372
    %v1713 = vpop.f32.mrf.mxu0
    %v1714 = vadd.f32 %v1701, %v1713
    %v1715 = vpop.f32.mrf.mxu0
    %1716 = vdwg.mxu0
    %1717 = vmatpush.bf16.msra.mxu0 %v1309
    %1718 = vmatpush.bf16.msra.mxu0 %v1305
    %1719 = vmatpush.bf16.msra.mxu0 %v1301
    %1720 = vmatpush.bf16.msra.mxu0 %v1297
    %1721 = vmatpush.bf16.msra.mxu0 %v1293
    %1722 = vmatpush.bf16.msra.mxu0 %v1289
    %1723 = vmatpush.bf16.msra.mxu0 %v1285
    %1724 = vmatpush.bf16.msra.mxu0 %v1281
    %1725 = vmatmul.bf16.gmra.mxu0 %v373
    %v1726 = vpop.f32.mrf.mxu0
    %v1727 = vadd.f32 %v1714, %v1726
    %v1728 = vpop.f32.mrf.mxu0
    %1729 = vdwg.mxu0
    %1730 = vmatpush.bf16.msra.mxu0 %v1341
    %1731 = vmatpush.bf16.msra.mxu0 %v1337
    %1732 = vmatpush.bf16.msra.mxu0 %v1333
    %1733 = vmatpush.bf16.msra.mxu0 %v1329
    %1734 = vmatpush.bf16.msra.mxu0 %v1325
    %1735 = vmatpush.bf16.msra.mxu0 %v1321
    %1736 = vmatpush.bf16.msra.mxu0 %v1317
    %1737 = vmatpush.bf16.msra.mxu0 %v1313
    %1738 = vmatmul.bf16.gmra.mxu0 %v374
    %v1739 = vpop.f32.mrf.mxu0
    %v1740 = vadd.f32 %v1727, %v1739
    %v1741 = vpop.f32.mrf.mxu0
    %1742 = vdwg.mxu0
    %1743 = vmatpush.bf16.msra.mxu0 %v1373
    %1744 = vmatpush.bf16.msra.mxu0 %v1369
    %1745 = vmatpush.bf16.msra.mxu0 %v1365
    %1746 = vmatpush.bf16.msra.mxu0 %v1361
    %1747 = vmatpush.bf16.msra.mxu0 %v1357
    %1748 = vmatpush.bf16.msra.mxu0 %v1353
    %1749 = vmatpush.bf16.msra.mxu0 %v1349
    %1750 = vmatpush.bf16.msra.mxu0 %v1345
    %1751 = vmatmul.bf16.gmra.mxu0 %v375
    %v1752 = vpop.f32.mrf.mxu0
    %v1753 = vadd.f32 %v1740, %v1752
    %v1754 = vpop.f32.mrf.mxu0
    %1755 = vdwg.mxu0
    %1756 = vmatpush.bf16.msra.mxu0 %v1405
    %1757 = vmatpush.bf16.msra.mxu0 %v1401
    %1758 = vmatpush.bf16.msra.mxu0 %v1397
    %1759 = vmatpush.bf16.msra.mxu0 %v1393
    %1760 = vmatpush.bf16.msra.mxu0 %v1389
    %1761 = vmatpush.bf16.msra.mxu0 %v1385
    %1762 = vmatpush.bf16.msra.mxu0 %v1381
    %1763 = vmatpush.bf16.msra.mxu0 %v1377
    %1764 = vmatmul.bf16.gmra.mxu0 %v376
    %v1765 = vpop.f32.mrf.mxu0
    %v1766 = vadd.f32 %v1753, %v1765
    %v1767 = vpop.f32.mrf.mxu0
    %1768 = vdwg.mxu0
    %1769 = vmatpush.bf16.msra.mxu0 %v1182
    %1770 = vmatpush.bf16.msra.mxu0 %v1178
    %1771 = vmatpush.bf16.msra.mxu0 %v1174
    %1772 = vmatpush.bf16.msra.mxu0 %v1170
    %1773 = vmatpush.bf16.msra.mxu0 %v1166
    %1774 = vmatpush.bf16.msra.mxu0 %v1162
    %1775 = vmatpush.bf16.msra.mxu0 %v1158
    %1776 = vmatpush.bf16.msra.mxu0 %v1154
    %1777 = vmatmul.bf16.gmra.mxu0 %v369
    %v1778 = vpop.f32.mrf.mxu0
    %v1779 = vadd.f32 %v350, %v1778
    %v1780 = vpop.f32.mrf.mxu0
    %1781 = vdwg.mxu0
    %1782 = vmatpush.bf16.msra.mxu0 %v1214
    %1783 = vmatpush.bf16.msra.mxu0 %v1210
    %1784 = vmatpush.bf16.msra.mxu0 %v1206
    %1785 = vmatpush.bf16.msra.mxu0 %v1202
    %1786 = vmatpush.bf16.msra.mxu0 %v1198
    %1787 = vmatpush.bf16.msra.mxu0 %v1194
    %1788 = vmatpush.bf16.msra.mxu0 %v1190
    %1789 = vmatpush.bf16.msra.mxu0 %v1186
    %1790 = vmatmul.bf16.gmra.mxu0 %v370
    %v1791 = vpop.f32.mrf.mxu0
    %v1792 = vadd.f32 %v1779, %v1791
    %v1793 = vpop.f32.mrf.mxu0
    %1794 = vdwg.mxu0
    %1795 = vmatpush.bf16.msra.mxu0 %v1246
    %1796 = vmatpush.bf16.msra.mxu0 %v1242
    %1797 = vmatpush.bf16.msra.mxu0 %v1238
    %1798 = vmatpush.bf16.msra.mxu0 %v1234
    %1799 = vmatpush.bf16.msra.mxu0 %v1230
    %1800 = vmatpush.bf16.msra.mxu0 %v1226
    %1801 = vmatpush.bf16.msra.mxu0 %v1222
    %1802 = vmatpush.bf16.msra.mxu0 %v1218
    %1803 = vmatmul.bf16.gmra.mxu0 %v371
    %v1804 = vpop.f32.mrf.mxu0
    %v1805 = vadd.f32 %v1792, %v1804
    %v1806 = vpop.f32.mrf.mxu0
    %1807 = vdwg.mxu0
    %1808 = vmatpush.bf16.msra.mxu0 %v1278
    %1809 = vmatpush.bf16.msra.mxu0 %v1274
    %1810 = vmatpush.bf16.msra.mxu0 %v1270
    %1811 = vmatpush.bf16.msra.mxu0 %v1266
    %1812 = vmatpush.bf16.msra.mxu0 %v1262
    %1813 = vmatpush.bf16.msra.mxu0 %v1258
    %1814 = vmatpush.bf16.msra.mxu0 %v1254
    %1815 = vmatpush.bf16.msra.mxu0 %v1250
    %1816 = vmatmul.bf16.gmra.mxu0 %v372
    %v1817 = vpop.f32.mrf.mxu0
    %v1818 = vadd.f32 %v1805, %v1817
    %v1819 = vpop.f32.mrf.mxu0
    %1820 = vdwg.mxu0
    %1821 = vmatpush.bf16.msra.mxu0 %v1310
    %1822 = vmatpush.bf16.msra.mxu0 %v1306
    %1823 = vmatpush.bf16.msra.mxu0 %v1302
    %1824 = vmatpush.bf16.msra.mxu0 %v1298
    %1825 = vmatpush.bf16.msra.mxu0 %v1294
    %1826 = vmatpush.bf16.msra.mxu0 %v1290
    %1827 = vmatpush.bf16.msra.mxu0 %v1286
    %1828 = vmatpush.bf16.msra.mxu0 %v1282
    %1829 = vmatmul.bf16.gmra.mxu0 %v373
    %v1830 = vpop.f32.mrf.mxu0
    %v1831 = vadd.f32 %v1818, %v1830
    %v1832 = vpop.f32.mrf.mxu0
    %1833 = vdwg.mxu0
    %1834 = vmatpush.bf16.msra.mxu0 %v1342
    %1835 = vmatpush.bf16.msra.mxu0 %v1338
    %1836 = vmatpush.bf16.msra.mxu0 %v1334
    %1837 = vmatpush.bf16.msra.mxu0 %v1330
    %1838 = vmatpush.bf16.msra.mxu0 %v1326
    %1839 = vmatpush.bf16.msra.mxu0 %v1322
    %1840 = vmatpush.bf16.msra.mxu0 %v1318
    %1841 = vmatpush.bf16.msra.mxu0 %v1314
    %1842 = vmatmul.bf16.gmra.mxu0 %v374
    %v1843 = vpop.f32.mrf.mxu0
    %v1844 = vadd.f32 %v1831, %v1843
    %v1845 = vpop.f32.mrf.mxu0
    %1846 = vdwg.mxu0
    %1847 = vmatpush.bf16.msra.mxu0 %v1374
    %1848 = vmatpush.bf16.msra.mxu0 %v1370
    %1849 = vmatpush.bf16.msra.mxu0 %v1366
    %1850 = vmatpush.bf16.msra.mxu0 %v1362
    %1851 = vmatpush.bf16.msra.mxu0 %v1358
    %1852 = vmatpush.bf16.msra.mxu0 %v1354
    %1853 = vmatpush.bf16.msra.mxu0 %v1350
    %1854 = vmatpush.bf16.msra.mxu0 %v1346
    %1855 = vmatmul.bf16.gmra.mxu0 %v375
    %v1856 = vpop.f32.mrf.mxu0
    %v1857 = vadd.f32 %v1844, %v1856
    %v1858 = vpop.f32.mrf.mxu0
    %1859 = vdwg.mxu0
    %1860 = vmatpush.bf16.msra.mxu0 %v1406
    %1861 = vmatpush.bf16.msra.mxu0 %v1402
    %1862 = vmatpush.bf16.msra.mxu0 %v1398
    %1863 = vmatpush.bf16.msra.mxu0 %v1394
    %1864 = vmatpush.bf16.msra.mxu0 %v1390
    %1865 = vmatpush.bf16.msra.mxu0 %v1386
    %1866 = vmatpush.bf16.msra.mxu0 %v1382
    %1867 = vmatpush.bf16.msra.mxu0 %v1378
    %1868 = vmatmul.bf16.gmra.mxu0 %v376
    %v1869 = vpop.f32.mrf.mxu0
    %v1870 = vadd.f32 %v1857, %v1869
    %v1871 = vpop.f32.mrf.mxu0
    %1872 = vdwg.mxu0
    %1873 = vmatpush.bf16.msra.mxu0 %v1183
    %1874 = vmatpush.bf16.msra.mxu0 %v1179
    %1875 = vmatpush.bf16.msra.mxu0 %v1175
    %1876 = vmatpush.bf16.msra.mxu0 %v1171
    %1877 = vmatpush.bf16.msra.mxu0 %v1167
    %1878 = vmatpush.bf16.msra.mxu0 %v1163
    %1879 = vmatpush.bf16.msra.mxu0 %v1159
    %1880 = vmatpush.bf16.msra.mxu0 %v1155
    %1881 = vmatmul.bf16.gmra.mxu0 %v369
    %v1882 = vpop.f32.mrf.mxu0
    %v1883 = vadd.f32 %v351, %v1882
    %v1884 = vpop.f32.mrf.mxu0
    %1885 = vdwg.mxu0
    %1886 = vmatpush.bf16.msra.mxu0 %v1215
    %1887 = vmatpush.bf16.msra.mxu0 %v1211
    %1888 = vmatpush.bf16.msra.mxu0 %v1207
    %1889 = vmatpush.bf16.msra.mxu0 %v1203
    %1890 = vmatpush.bf16.msra.mxu0 %v1199
    %1891 = vmatpush.bf16.msra.mxu0 %v1195
    %1892 = vmatpush.bf16.msra.mxu0 %v1191
    %1893 = vmatpush.bf16.msra.mxu0 %v1187
    %1894 = vmatmul.bf16.gmra.mxu0 %v370
    %v1895 = vpop.f32.mrf.mxu0
    %v1896 = vadd.f32 %v1883, %v1895
    %v1897 = vpop.f32.mrf.mxu0
    %1898 = vdwg.mxu0
    %1899 = vmatpush.bf16.msra.mxu0 %v1247
    %1900 = vmatpush.bf16.msra.mxu0 %v1243
    %1901 = vmatpush.bf16.msra.mxu0 %v1239
    %1902 = vmatpush.bf16.msra.mxu0 %v1235
    %1903 = vmatpush.bf16.msra.mxu0 %v1231
    %1904 = vmatpush.bf16.msra.mxu0 %v1227
    %1905 = vmatpush.bf16.msra.mxu0 %v1223
    %1906 = vmatpush.bf16.msra.mxu0 %v1219
    %1907 = vmatmul.bf16.gmra.mxu0 %v371
    %v1908 = vpop.f32.mrf.mxu0
    %v1909 = vadd.f32 %v1896, %v1908
    %v1910 = vpop.f32.mrf.mxu0
    %1911 = vdwg.mxu0
    %1912 = vmatpush.bf16.msra.mxu0 %v1279
    %1913 = vmatpush.bf16.msra.mxu0 %v1275
    %1914 = vmatpush.bf16.msra.mxu0 %v1271
    %1915 = vmatpush.bf16.msra.mxu0 %v1267
    %1916 = vmatpush.bf16.msra.mxu0 %v1263
    %1917 = vmatpush.bf16.msra.mxu0 %v1259
    %1918 = vmatpush.bf16.msra.mxu0 %v1255
    %1919 = vmatpush.bf16.msra.mxu0 %v1251
    %1920 = vmatmul.bf16.gmra.mxu0 %v372
    %v1921 = vpop.f32.mrf.mxu0
    %v1922 = vadd.f32 %v1909, %v1921
    %v1923 = vpop.f32.mrf.mxu0
    %1924 = vdwg.mxu0
    %1925 = vmatpush.bf16.msra.mxu0 %v1311
    %1926 = vmatpush.bf16.msra.mxu0 %v1307
    %1927 = vmatpush.bf16.msra.mxu0 %v1303
    %1928 = vmatpush.bf16.msra.mxu0 %v1299
    %1929 = vmatpush.bf16.msra.mxu0 %v1295
    %1930 = vmatpush.bf16.msra.mxu0 %v1291
    %1931 = vmatpush.bf16.msra.mxu0 %v1287
    %1932 = vmatpush.bf16.msra.mxu0 %v1283
    %1933 = vmatmul.bf16.gmra.mxu0 %v373
    %v1934 = vpop.f32.mrf.mxu0
    %v1935 = vadd.f32 %v1922, %v1934
    %v1936 = vpop.f32.mrf.mxu0
    %1937 = vdwg.mxu0
    %1938 = vmatpush.bf16.msra.mxu0 %v1343
    %1939 = vmatpush.bf16.msra.mxu0 %v1339
    %1940 = vmatpush.bf16.msra.mxu0 %v1335
    %1941 = vmatpush.bf16.msra.mxu0 %v1331
    %1942 = vmatpush.bf16.msra.mxu0 %v1327
    %1943 = vmatpush.bf16.msra.mxu0 %v1323
    %1944 = vmatpush.bf16.msra.mxu0 %v1319
    %1945 = vmatpush.bf16.msra.mxu0 %v1315
    %1946 = vmatmul.bf16.gmra.mxu0 %v374
    %v1947 = vpop.f32.mrf.mxu0
    %v1948 = vadd.f32 %v1935, %v1947
    %v1949 = vpop.f32.mrf.mxu0
    %1950 = vdwg.mxu0
    %1951 = vmatpush.bf16.msra.mxu0 %v1375
    %1952 = vmatpush.bf16.msra.mxu0 %v1371
    %1953 = vmatpush.bf16.msra.mxu0 %v1367
    %1954 = vmatpush.bf16.msra.mxu0 %v1363
    %1955 = vmatpush.bf16.msra.mxu0 %v1359
    %1956 = vmatpush.bf16.msra.mxu0 %v1355
    %1957 = vmatpush.bf16.msra.mxu0 %v1351
    %1958 = vmatpush.bf16.msra.mxu0 %v1347
    %1959 = vmatmul.bf16.gmra.mxu0 %v375
    %v1960 = vpop.f32.mrf.mxu0
    %v1961 = vadd.f32 %v1948, %v1960
    %v1962 = vpop.f32.mrf.mxu0
    %1963 = vdwg.mxu0
    %1964 = vmatpush.bf16.msra.mxu0 %v1407
    %1965 = vmatpush.bf16.msra.mxu0 %v1403
    %1966 = vmatpush.bf16.msra.mxu0 %v1399
    %1967 = vmatpush.bf16.msra.mxu0 %v1395
    %1968 = vmatpush.bf16.msra.mxu0 %v1391
    %1969 = vmatpush.bf16.msra.mxu0 %v1387
    %1970 = vmatpush.bf16.msra.mxu0 %v1383
    %1971 = vmatpush.bf16.msra.mxu0 %v1379
    %1972 = vmatmul.bf16.gmra.mxu0 %v376
    %v1973 = vpop.f32.mrf.mxu0
    %v1974 = vadd.f32 %v1961, %v1973
    %v1975 = vpop.f32.mrf.mxu0
    %1976 = vdwg.mxu0
    %1977 = vmatpush.bf16.msra.mxu0 %v1184
    %1978 = vmatpush.bf16.msra.mxu0 %v1180
    %1979 = vmatpush.bf16.msra.mxu0 %v1176
    %1980 = vmatpush.bf16.msra.mxu0 %v1172
    %1981 = vmatpush.bf16.msra.mxu0 %v1168
    %1982 = vmatpush.bf16.msra.mxu0 %v1164
    %1983 = vmatpush.bf16.msra.mxu0 %v1160
    %1984 = vmatpush.bf16.msra.mxu0 %v1156
    %1985 = vmatmul.bf16.gmra.mxu0 %v369
    %v1986 = vpop.f32.mrf.mxu0
    %v1987 = vadd.f32 %v352, %v1986
    %v1988 = vpop.f32.mrf.mxu0
    %1989 = vdwg.mxu0
    %1990 = vmatpush.bf16.msra.mxu0 %v1216
    %1991 = vmatpush.bf16.msra.mxu0 %v1212
    %1992 = vmatpush.bf16.msra.mxu0 %v1208
    %1993 = vmatpush.bf16.msra.mxu0 %v1204
    %1994 = vmatpush.bf16.msra.mxu0 %v1200
    %1995 = vmatpush.bf16.msra.mxu0 %v1196
    %1996 = vmatpush.bf16.msra.mxu0 %v1192
    %1997 = vmatpush.bf16.msra.mxu0 %v1188
    %1998 = vmatmul.bf16.gmra.mxu0 %v370
    %v1999 = vpop.f32.mrf.mxu0
    %v2000 = vadd.f32 %v1987, %v1999
    %v2001 = vpop.f32.mrf.mxu0
    %2002 = vdwg.mxu0
    %2003 = vmatpush.bf16.msra.mxu0 %v1248
    %2004 = vmatpush.bf16.msra.mxu0 %v1244
    %2005 = vmatpush.bf16.msra.mxu0 %v1240
    %2006 = vmatpush.bf16.msra.mxu0 %v1236
    %2007 = vmatpush.bf16.msra.mxu0 %v1232
    %2008 = vmatpush.bf16.msra.mxu0 %v1228
    %2009 = vmatpush.bf16.msra.mxu0 %v1224
    %2010 = vmatpush.bf16.msra.mxu0 %v1220
    %2011 = vmatmul.bf16.gmra.mxu0 %v371
    %v2012 = vpop.f32.mrf.mxu0
    %v2013 = vadd.f32 %v2000, %v2012
    %v2014 = vpop.f32.mrf.mxu0
    %2015 = vdwg.mxu0
    %2016 = vmatpush.bf16.msra.mxu0 %v1280
    %2017 = vmatpush.bf16.msra.mxu0 %v1276
    %2018 = vmatpush.bf16.msra.mxu0 %v1272
    %2019 = vmatpush.bf16.msra.mxu0 %v1268
    %2020 = vmatpush.bf16.msra.mxu0 %v1264
    %2021 = vmatpush.bf16.msra.mxu0 %v1260
    %2022 = vmatpush.bf16.msra.mxu0 %v1256
    %2023 = vmatpush.bf16.msra.mxu0 %v1252
    %2024 = vmatmul.bf16.gmra.mxu0 %v372
    %v2025 = vpop.f32.mrf.mxu0
    %v2026 = vadd.f32 %v2013, %v2025
    %v2027 = vpop.f32.mrf.mxu0
    %2028 = vdwg.mxu0
    %2029 = vmatpush.bf16.msra.mxu0 %v1312
    %2030 = vmatpush.bf16.msra.mxu0 %v1308
    %2031 = vmatpush.bf16.msra.mxu0 %v1304
    %2032 = vmatpush.bf16.msra.mxu0 %v1300
    %2033 = vmatpush.bf16.msra.mxu0 %v1296
    %2034 = vmatpush.bf16.msra.mxu0 %v1292
    %2035 = vmatpush.bf16.msra.mxu0 %v1288
    %2036 = vmatpush.bf16.msra.mxu0 %v1284
    %2037 = vmatmul.bf16.gmra.mxu0 %v373
    %v2038 = vpop.f32.mrf.mxu0
    %v2039 = vadd.f32 %v2026, %v2038
    %v2040 = vpop.f32.mrf.mxu0
    %2041 = vdwg.mxu0
    %2042 = vmatpush.bf16.msra.mxu0 %v1344
    %2043 = vmatpush.bf16.msra.mxu0 %v1340
    %2044 = vmatpush.bf16.msra.mxu0 %v1336
    %2045 = vmatpush.bf16.msra.mxu0 %v1332
    %2046 = vmatpush.bf16.msra.mxu0 %v1328
    %2047 = vmatpush.bf16.msra.mxu0 %v1324
    %2048 = vmatpush.bf16.msra.mxu0 %v1320
    %2049 = vmatpush.bf16.msra.mxu0 %v1316
    %2050 = vmatmul.bf16.gmra.mxu0 %v374
    %v2051 = vpop.f32.mrf.mxu0
    %v2052 = vadd.f32 %v2039, %v2051
    %v2053 = vpop.f32.mrf.mxu0
    %2054 = vdwg.mxu0
    %2055 = vmatpush.bf16.msra.mxu0 %v1376
    %2056 = vmatpush.bf16.msra.mxu0 %v1372
    %2057 = vmatpush.bf16.msra.mxu0 %v1368
    %2058 = vmatpush.bf16.msra.mxu0 %v1364
    %2059 = vmatpush.bf16.msra.mxu0 %v1360
    %2060 = vmatpush.bf16.msra.mxu0 %v1356
    %2061 = vmatpush.bf16.msra.mxu0 %v1352
    %2062 = vmatpush.bf16.msra.mxu0 %v1348
    %2063 = vmatmul.bf16.gmra.mxu0 %v375
    %v2064 = vpop.f32.mrf.mxu0
    %v2065 = vadd.f32 %v2052, %v2064
    %v2066 = vpop.f32.mrf.mxu0
    %2067 = vdwg.mxu0
    %2068 = vmatpush.bf16.msra.mxu0 %v1408
    %2069 = vmatpush.bf16.msra.mxu0 %v1404
    %2070 = vmatpush.bf16.msra.mxu0 %v1400
    %2071 = vmatpush.bf16.msra.mxu0 %v1396
    %2072 = vmatpush.bf16.msra.mxu0 %v1392
    %2073 = vmatpush.bf16.msra.mxu0 %v1388
    %2074 = vmatpush.bf16.msra.mxu0 %v1384
    %2075 = vmatpush.bf16.msra.mxu0 %v1380
    %2076 = vmatmul.bf16.gmra.mxu0 %v376
    %v2077 = vpop.f32.mrf.mxu0
    %v2078 = vadd.f32 %v2065, %v2077
    %v2079 = vpop.f32.mrf.mxu0
    %2080 = vdwg.mxu0
    %vm2081 = vcmp.gt.f32.partialorder %v1766, 0.0
    %vm2082 = vcmp.gt.f32.partialorder %v1870, 0.0
    %vm2083 = vcmp.gt.f32.partialorder %v1974, 0.0
    %vm2084 = vcmp.gt.f32.partialorder %v2078, 0.0
    %v2085 = vmul.f32 %v1766, 0.2
    %v2086 = vmul.f32 %v1870, 0.2
    %v2087 = vmul.f32 %v1974, 0.2
    %v2088 = vmul.f32 %v2078, 0.2
    %v2089 = vsel %vm2081, %v1766, %v2085
    %v2090 = vsel %vm2082, %v1870, %v2086
    %v2091 = vsel %vm2083, %v1974, %v2087
    %v2092 = vsel %vm2084, %v2078, %v2088
    %v2093 = vpack.c.bf16 %v2089, %v2089
    %v2094 = vpack.c.bf16 %v2090, %v2090
    %v2095 = vpack.c.bf16 %v2091, %v2091
    %v2096 = vpack.c.bf16 %v2092, %v2092
    %v2097 = vld [vmem:[#allocation8] sm:$0xff]
    %v2098 = vld [vmem:[#allocation8 + $0x8] sm:$0xff]
    %v2099 = vld [vmem:[#allocation8 + $0x10] sm:$0xff]
    %v2100 = vld [vmem:[#allocation8 + $0x18] sm:$0xff]
    %v2101 = vld [vmem:[#allocation8 + $0x20] sm:$0xff]
    %v2102 = vld [vmem:[#allocation8 + $0x28] sm:$0xff]
    %v2103 = vld [vmem:[#allocation8 + $0x30] sm:$0xff]
    %v2104 = vld [vmem:[#allocation8 + $0x38] sm:$0xff]
    %v2105 = vld [vmem:[#allocation8 + $0x40] sm:$0xff]
    %v2106 = vld [vmem:[#allocation8 + $0x48] sm:$0xff]
    %v2107 = vld [vmem:[#allocation8 + $0x50] sm:$0xff]
    %v2108 = vld [vmem:[#allocation8 + $0x58] sm:$0xff]
    %v2109 = vld [vmem:[#allocation8 + $0x60] sm:$0xff]
    %v2110 = vld [vmem:[#allocation8 + $0x68] sm:$0xff]
    %v2111 = vld [vmem:[#allocation8 + $0x70] sm:$0xff]
    %v2112 = vld [vmem:[#allocation8 + $0x78] sm:$0xff]
    %v2113 = vld [vmem:[#allocation8 + $0x80] sm:$0xff]
    %v2114 = vld [vmem:[#allocation8 + $0x88] sm:$0xff]
    %v2115 = vld [vmem:[#allocation8 + $0x90] sm:$0xff]
    %v2116 = vld [vmem:[#allocation8 + $0x98] sm:$0xff]
    %v2117 = vld [vmem:[#allocation8 + $0xa0] sm:$0xff]
    %v2118 = vld [vmem:[#allocation8 + $0xa8] sm:$0xff]
    %v2119 = vld [vmem:[#allocation8 + $0xb0] sm:$0xff]
    %v2120 = vld [vmem:[#allocation8 + $0xb8] sm:$0xff]
    %v2121 = vld [vmem:[#allocation8 + $0xc0] sm:$0xff]
    %v2122 = vld [vmem:[#allocation8 + $0xc8] sm:$0xff]
    %v2123 = vld [vmem:[#allocation8 + $0xd0] sm:$0xff]
    %v2124 = vld [vmem:[#allocation8 + $0xd8] sm:$0xff]
    %v2125 = vld [vmem:[#allocation8 + $0xe0] sm:$0xff]
    %v2126 = vld [vmem:[#allocation8 + $0xe8] sm:$0xff]
    %v2127 = vld [vmem:[#allocation8 + $0xf0] sm:$0xff]
    %v2128 = vld [vmem:[#allocation8 + $0xf8] sm:$0xff]
    %v2129 = vld [vmem:[#allocation8 + $0x100] sm:$0xff]
    %v2130 = vld [vmem:[#allocation8 + $0x108] sm:$0xff]
    %v2131 = vld [vmem:[#allocation8 + $0x110] sm:$0xff]
    %v2132 = vld [vmem:[#allocation8 + $0x118] sm:$0xff]
    %v2133 = vld [vmem:[#allocation8 + $0x120] sm:$0xff]
    %v2134 = vld [vmem:[#allocation8 + $0x128] sm:$0xff]
    %v2135 = vld [vmem:[#allocation8 + $0x130] sm:$0xff]
    %v2136 = vld [vmem:[#allocation8 + $0x138] sm:$0xff]
    %v2137 = vld [vmem:[#allocation8 + $0x140] sm:$0xff]
    %v2138 = vld [vmem:[#allocation8 + $0x148] sm:$0xff]
    %v2139 = vld [vmem:[#allocation8 + $0x150] sm:$0xff]
    %v2140 = vld [vmem:[#allocation8 + $0x158] sm:$0xff]
    %v2141 = vld [vmem:[#allocation8 + $0x160] sm:$0xff]
    %v2142 = vld [vmem:[#allocation8 + $0x168] sm:$0xff]
    %v2143 = vld [vmem:[#allocation8 + $0x170] sm:$0xff]
    %v2144 = vld [vmem:[#allocation8 + $0x178] sm:$0xff]
    %v2145 = vld [vmem:[#allocation8 + $0x180] sm:$0xff]
    %v2146 = vld [vmem:[#allocation8 + $0x188] sm:$0xff]
    %v2147 = vld [vmem:[#allocation8 + $0x190] sm:$0xff]
    %v2148 = vld [vmem:[#allocation8 + $0x198] sm:$0xff]
    %v2149 = vld [vmem:[#allocation8 + $0x1a0] sm:$0xff]
    %v2150 = vld [vmem:[#allocation8 + $0x1a8] sm:$0xff]
    %v2151 = vld [vmem:[#allocation8 + $0x1b0] sm:$0xff]
    %v2152 = vld [vmem:[#allocation8 + $0x1b8] sm:$0xff]
    %v2153 = vld [vmem:[#allocation8 + $0x1c0] sm:$0xff]
    %v2154 = vld [vmem:[#allocation8 + $0x1c8] sm:$0xff]
    %v2155 = vld [vmem:[#allocation8 + $0x1d0] sm:$0xff]
    %v2156 = vld [vmem:[#allocation8 + $0x1d8] sm:$0xff]
    %v2157 = vld [vmem:[#allocation8 + $0x1e0] sm:$0xff]
    %v2158 = vld [vmem:[#allocation8 + $0x1e8] sm:$0xff]
    %v2159 = vld [vmem:[#allocation8 + $0x1f0] sm:$0xff]
    %v2160 = vld [vmem:[#allocation8 + $0x1f8] sm:$0xff]
    %v2161 = vld [vmem:[%s4] sm:$0x3]
    %v2163 = vperm.slane %v2161, 0
    %v2164 = vperm.slane %v2161, 1
    %v2231 = vunpack.c.l.b16 %v2097
    %v2232 = vunpack.c.h.b16 %v2097
    %v2233 = vunpack.c.l.b16 %v2098
    %v2234 = vunpack.c.h.b16 %v2098
    %v2235 = vunpack.c.l.b16 %v2099
    %v2236 = vunpack.c.h.b16 %v2099
    %v2237 = vunpack.c.l.b16 %v2100
    %v2238 = vunpack.c.h.b16 %v2100
    %v2239 = vunpack.c.l.b16 %v2101
    %v2240 = vunpack.c.h.b16 %v2101
    %v2241 = vunpack.c.l.b16 %v2102
    %v2242 = vunpack.c.h.b16 %v2102
    %v2243 = vunpack.c.l.b16 %v2103
    %v2244 = vunpack.c.h.b16 %v2103
    %v2245 = vunpack.c.l.b16 %v2104
    %v2246 = vunpack.c.h.b16 %v2104
    %v2247 = vunpack.c.l.b16 %v2105
    %v2248 = vunpack.c.h.b16 %v2105
    %v2249 = vunpack.c.l.b16 %v2106
    %v2250 = vunpack.c.h.b16 %v2106
    %v2251 = vunpack.c.l.b16 %v2107
    %v2252 = vunpack.c.h.b16 %v2107
    %v2253 = vunpack.c.l.b16 %v2108
    %v2254 = vunpack.c.h.b16 %v2108
    %v2255 = vunpack.c.l.b16 %v2109
    %v2256 = vunpack.c.h.b16 %v2109
    %v2257 = vunpack.c.l.b16 %v2110
    %v2258 = vunpack.c.h.b16 %v2110
    %v2259 = vunpack.c.l.b16 %v2111
    %v2260 = vunpack.c.h.b16 %v2111
    %v2261 = vunpack.c.l.b16 %v2112
    %v2262 = vunpack.c.h.b16 %v2112
    %v2263 = vunpack.c.l.b16 %v2113
    %v2264 = vunpack.c.h.b16 %v2113
    %v2265 = vunpack.c.l.b16 %v2114
    %v2266 = vunpack.c.h.b16 %v2114
    %v2267 = vunpack.c.l.b16 %v2115
    %v2268 = vunpack.c.h.b16 %v2115
    %v2269 = vunpack.c.l.b16 %v2116
    %v2270 = vunpack.c.h.b16 %v2116
    %v2271 = vunpack.c.l.b16 %v2117
    %v2272 = vunpack.c.h.b16 %v2117
    %v2273 = vunpack.c.l.b16 %v2118
    %v2274 = vunpack.c.h.b16 %v2118
    %v2275 = vunpack.c.l.b16 %v2119
    %v2276 = vunpack.c.h.b16 %v2119
    %v2277 = vunpack.c.l.b16 %v2120
    %v2278 = vunpack.c.h.b16 %v2120
    %v2279 = vunpack.c.l.b16 %v2121
    %v2280 = vunpack.c.h.b16 %v2121
    %v2281 = vunpack.c.l.b16 %v2122
    %v2282 = vunpack.c.h.b16 %v2122
    %v2283 = vunpack.c.l.b16 %v2123
    %v2284 = vunpack.c.h.b16 %v2123
    %v2285 = vunpack.c.l.b16 %v2124
    %v2286 = vunpack.c.h.b16 %v2124
    %v2287 = vunpack.c.l.b16 %v2125
    %v2288 = vunpack.c.h.b16 %v2125
    %v2289 = vunpack.c.l.b16 %v2126
    %v2290 = vunpack.c.h.b16 %v2126
    %v2291 = vunpack.c.l.b16 %v2127
    %v2292 = vunpack.c.h.b16 %v2127
    %v2293 = vunpack.c.l.b16 %v2128
    %v2294 = vunpack.c.h.b16 %v2128
    %v2295 = vunpack.c.l.b16 %v2129
    %v2296 = vunpack.c.h.b16 %v2129
    %v2297 = vunpack.c.l.b16 %v2130
    %v2298 = vunpack.c.h.b16 %v2130
    %v2299 = vunpack.c.l.b16 %v2131
    %v2300 = vunpack.c.h.b16 %v2131
    %v2301 = vunpack.c.l.b16 %v2132
    %v2302 = vunpack.c.h.b16 %v2132
    %v2303 = vunpack.c.l.b16 %v2133
    %v2304 = vunpack.c.h.b16 %v2133
    %v2305 = vunpack.c.l.b16 %v2134
    %v2306 = vunpack.c.h.b16 %v2134
    %v2307 = vunpack.c.l.b16 %v2135
    %v2308 = vunpack.c.h.b16 %v2135
    %v2309 = vunpack.c.l.b16 %v2136
    %v2310 = vunpack.c.h.b16 %v2136
    %v2311 = vunpack.c.l.b16 %v2137
    %v2312 = vunpack.c.h.b16 %v2137
    %v2313 = vunpack.c.l.b16 %v2138
    %v2314 = vunpack.c.h.b16 %v2138
    %v2315 = vunpack.c.l.b16 %v2139
    %v2316 = vunpack.c.h.b16 %v2139
    %v2317 = vunpack.c.l.b16 %v2140
    %v2318 = vunpack.c.h.b16 %v2140
    %v2319 = vunpack.c.l.b16 %v2141
    %v2320 = vunpack.c.h.b16 %v2141
    %v2321 = vunpack.c.l.b16 %v2142
    %v2322 = vunpack.c.h.b16 %v2142
    %v2323 = vunpack.c.l.b16 %v2143
    %v2324 = vunpack.c.h.b16 %v2143
    %v2325 = vunpack.c.l.b16 %v2144
    %v2326 = vunpack.c.h.b16 %v2144
    %v2327 = vunpack.c.l.b16 %v2145
    %v2328 = vunpack.c.h.b16 %v2145
    %v2329 = vunpack.c.l.b16 %v2146
    %v2330 = vunpack.c.h.b16 %v2146
    %v2331 = vunpack.c.l.b16 %v2147
    %v2332 = vunpack.c.h.b16 %v2147
    %v2333 = vunpack.c.l.b16 %v2148
    %v2334 = vunpack.c.h.b16 %v2148
    %v2335 = vunpack.c.l.b16 %v2149
    %v2336 = vunpack.c.h.b16 %v2149
    %v2337 = vunpack.c.l.b16 %v2150
    %v2338 = vunpack.c.h.b16 %v2150
    %v2339 = vunpack.c.l.b16 %v2151
    %v2340 = vunpack.c.h.b16 %v2151
    %v2341 = vunpack.c.l.b16 %v2152
    %v2342 = vunpack.c.h.b16 %v2152
    %v2343 = vunpack.c.l.b16 %v2153
    %v2344 = vunpack.c.h.b16 %v2153
    %v2345 = vunpack.c.l.b16 %v2154
    %v2346 = vunpack.c.h.b16 %v2154
    %v2347 = vunpack.c.l.b16 %v2155
    %v2348 = vunpack.c.h.b16 %v2155
    %v2349 = vunpack.c.l.b16 %v2156
    %v2350 = vunpack.c.h.b16 %v2156
    %v2351 = vunpack.c.l.b16 %v2157
    %v2352 = vunpack.c.h.b16 %v2157
    %v2353 = vunpack.c.l.b16 %v2158
    %v2354 = vunpack.c.h.b16 %v2158
    %v2355 = vunpack.c.l.b16 %v2159
    %v2356 = vunpack.c.h.b16 %v2159
    %v2357 = vunpack.c.l.b16 %v2160
    %v2358 = vunpack.c.h.b16 %v2160
    %v2359 = vpack.c.b16 %v2233, %v2231
    %v2360 = vpack.c.b16 %v2234, %v2232
    %v2361 = vpack.c.b16 %v2237, %v2235
    %v2362 = vpack.c.b16 %v2238, %v2236
    %v2363 = vpack.c.b16 %v2241, %v2239
    %v2364 = vpack.c.b16 %v2242, %v2240
    %v2365 = vpack.c.b16 %v2245, %v2243
    %v2366 = vpack.c.b16 %v2246, %v2244
    %v2367 = vpack.c.b16 %v2249, %v2247
    %v2368 = vpack.c.b16 %v2250, %v2248
    %v2369 = vpack.c.b16 %v2253, %v2251
    %v2370 = vpack.c.b16 %v2254, %v2252
    %v2371 = vpack.c.b16 %v2257, %v2255
    %v2372 = vpack.c.b16 %v2258, %v2256
    %v2373 = vpack.c.b16 %v2261, %v2259
    %v2374 = vpack.c.b16 %v2262, %v2260
    %v2375 = vpack.c.b16 %v2265, %v2263
    %v2376 = vpack.c.b16 %v2266, %v2264
    %v2377 = vpack.c.b16 %v2269, %v2267
    %v2378 = vpack.c.b16 %v2270, %v2268
    %v2379 = vpack.c.b16 %v2273, %v2271
    %v2380 = vpack.c.b16 %v2274, %v2272
    %v2381 = vpack.c.b16 %v2277, %v2275
    %v2382 = vpack.c.b16 %v2278, %v2276
    %v2383 = vpack.c.b16 %v2281, %v2279
    %v2384 = vpack.c.b16 %v2282, %v2280
    %v2385 = vpack.c.b16 %v2285, %v2283
    %v2386 = vpack.c.b16 %v2286, %v2284
    %v2387 = vpack.c.b16 %v2289, %v2287
    %v2388 = vpack.c.b16 %v2290, %v2288
    %v2389 = vpack.c.b16 %v2293, %v2291
    %v2390 = vpack.c.b16 %v2294, %v2292
    %v2391 = vpack.c.b16 %v2297, %v2295
    %v2392 = vpack.c.b16 %v2298, %v2296
    %v2393 = vpack.c.b16 %v2301, %v2299
    %v2394 = vpack.c.b16 %v2302, %v2300
    %v2395 = vpack.c.b16 %v2305, %v2303
    %v2396 = vpack.c.b16 %v2306, %v2304
    %v2397 = vpack.c.b16 %v2309, %v2307
    %v2398 = vpack.c.b16 %v2310, %v2308
    %v2399 = vpack.c.b16 %v2313, %v2311
    %v2400 = vpack.c.b16 %v2314, %v2312
    %v2401 = vpack.c.b16 %v2317, %v2315
    %v2402 = vpack.c.b16 %v2318, %v2316
    %v2403 = vpack.c.b16 %v2321, %v2319
    %v2404 = vpack.c.b16 %v2322, %v2320
    %v2405 = vpack.c.b16 %v2325, %v2323
    %v2406 = vpack.c.b16 %v2326, %v2324
    %v2407 = vpack.c.b16 %v2329, %v2327
    %v2408 = vpack.c.b16 %v2330, %v2328
    %v2409 = vpack.c.b16 %v2333, %v2331
    %v2410 = vpack.c.b16 %v2334, %v2332
    %v2411 = vpack.c.b16 %v2337, %v2335
    %v2412 = vpack.c.b16 %v2338, %v2336
    %v2413 = vpack.c.b16 %v2341, %v2339
    %v2414 = vpack.c.b16 %v2342, %v2340
    %v2415 = vpack.c.b16 %v2345, %v2343
    %v2416 = vpack.c.b16 %v2346, %v2344
    %v2417 = vpack.c.b16 %v2349, %v2347
    %v2418 = vpack.c.b16 %v2350, %v2348
    %v2419 = vpack.c.b16 %v2353, %v2351
    %v2420 = vpack.c.b16 %v2354, %v2352
    %v2421 = vpack.c.b16 %v2357, %v2355
    %v2422 = vpack.c.b16 %v2358, %v2356
    %2487 = vmatpush.bf16.msra.mxu0 %v2373
    %2488 = vmatpush.bf16.msra.mxu0 %v2371
    %2489 = vmatpush.bf16.msra.mxu0 %v2369
    %2490 = vmatpush.bf16.msra.mxu0 %v2367
    %2491 = vmatpush.bf16.msra.mxu0 %v2365
    %2492 = vmatpush.bf16.msra.mxu0 %v2363
    %2493 = vmatpush.bf16.msra.mxu0 %v2361
    %2494 = vmatpush.bf16.msra.mxu0 %v2359
    %2495 = vmatmul.bf16.gmra.mxu0 %v2093
    %v2496 = vpop.f32.mrf.mxu0
    %v2497 = vadd.f32 %v2163, %v2496
    %v2498 = vpop.f32.mrf.mxu0
    %2499 = vdwg.mxu0
    %2500 = vmatpush.bf16.msra.mxu0 %v2389
    %2501 = vmatpush.bf16.msra.mxu0 %v2387
    %2502 = vmatpush.bf16.msra.mxu0 %v2385
    %2503 = vmatpush.bf16.msra.mxu0 %v2383
    %2504 = vmatpush.bf16.msra.mxu0 %v2381
    %2505 = vmatpush.bf16.msra.mxu0 %v2379
    %2506 = vmatpush.bf16.msra.mxu0 %v2377
    %2507 = vmatpush.bf16.msra.mxu0 %v2375
    %2508 = vmatmul.bf16.gmra.mxu0 %v2094
    %v2509 = vpop.f32.mrf.mxu0
    %v2510 = vadd.f32 %v2497, %v2509
    %v2511 = vpop.f32.mrf.mxu0
    %2512 = vdwg.mxu0
    %2513 = vmatpush.bf16.msra.mxu0 %v2405
    %2514 = vmatpush.bf16.msra.mxu0 %v2403
    %2515 = vmatpush.bf16.msra.mxu0 %v2401
    %2516 = vmatpush.bf16.msra.mxu0 %v2399
    %2517 = vmatpush.bf16.msra.mxu0 %v2397
    %2518 = vmatpush.bf16.msra.mxu0 %v2395
    %2519 = vmatpush.bf16.msra.mxu0 %v2393
    %2520 = vmatpush.bf16.msra.mxu0 %v2391
    %2521 = vmatmul.bf16.gmra.mxu0 %v2095
    %v2522 = vpop.f32.mrf.mxu0
    %v2523 = vadd.f32 %v2510, %v2522
    %v2524 = vpop.f32.mrf.mxu0
    %2525 = vdwg.mxu0
    %2526 = vmatpush.bf16.msra.mxu0 %v2421
    %2527 = vmatpush.bf16.msra.mxu0 %v2419
    %2528 = vmatpush.bf16.msra.mxu0 %v2417
    %2529 = vmatpush.bf16.msra.mxu0 %v2415
    %2530 = vmatpush.bf16.msra.mxu0 %v2413
    %2531 = vmatpush.bf16.msra.mxu0 %v2411
    %2532 = vmatpush.bf16.msra.mxu0 %v2409
    %2533 = vmatpush.bf16.msra.mxu0 %v2407
    %2534 = vmatmul.bf16.gmra.mxu0 %v2096
    %v2535 = vpop.f32.mrf.mxu0
    %v2536 = vadd.f32 %v2523, %v2535
    %v2537 = vpop.f32.mrf.mxu0
    %2538 = vdwg.mxu0
    %2539 = vmatpush.bf16.msra.mxu0 %v2374
    %2540 = vmatpush.bf16.msra.mxu0 %v2372
    %2541 = vmatpush.bf16.msra.mxu0 %v2370
    %2542 = vmatpush.bf16.msra.mxu0 %v2368
    %2543 = vmatpush.bf16.msra.mxu0 %v2366
    %2544 = vmatpush.bf16.msra.mxu0 %v2364
    %2545 = vmatpush.bf16.msra.mxu0 %v2362
    %2546 = vmatpush.bf16.msra.mxu0 %v2360
    %2547 = vmatmul.bf16.gmra.mxu0 %v2093
    %v2548 = vpop.f32.mrf.mxu0
    %v2549 = vadd.f32 %v2164, %v2548
    %v2550 = vpop.f32.mrf.mxu0
    %2551 = vdwg.mxu0
    %2552 = vmatpush.bf16.msra.mxu0 %v2390
    %2553 = vmatpush.bf16.msra.mxu0 %v2388
    %2554 = vmatpush.bf16.msra.mxu0 %v2386
    %2555 = vmatpush.bf16.msra.mxu0 %v2384
    %2556 = vmatpush.bf16.msra.mxu0 %v2382
    %2557 = vmatpush.bf16.msra.mxu0 %v2380
    %2558 = vmatpush.bf16.msra.mxu0 %v2378
    %2559 = vmatpush.bf16.msra.mxu0 %v2376
    %2560 = vmatmul.bf16.gmra.mxu0 %v2094
    %v2561 = vpop.f32.mrf.mxu0
    %v2562 = vadd.f32 %v2549, %v2561
    %v2563 = vpop.f32.mrf.mxu0
    %2564 = vdwg.mxu0
    %2565 = vmatpush.bf16.msra.mxu0 %v2406
    %2566 = vmatpush.bf16.msra.mxu0 %v2404
    %2567 = vmatpush.bf16.msra.mxu0 %v2402
    %2568 = vmatpush.bf16.msra.mxu0 %v2400
    %2569 = vmatpush.bf16.msra.mxu0 %v2398
    %2570 = vmatpush.bf16.msra.mxu0 %v2396
    %2571 = vmatpush.bf16.msra.mxu0 %v2394
    %2572 = vmatpush.bf16.msra.mxu0 %v2392
    %2573 = vmatmul.bf16.gmra.mxu0 %v2095
    %v2574 = vpop.f32.mrf.mxu0
    %v2575 = vadd.f32 %v2562, %v2574
    %v2576 = vpop.f32.mrf.mxu0
    %2577 = vdwg.mxu0
    %2578 = vmatpush.bf16.msra.mxu0 %v2422
    %2579 = vmatpush.bf16.msra.mxu0 %v2420
    %2580 = vmatpush.bf16.msra.mxu0 %v2418
    %2581 = vmatpush.bf16.msra.mxu0 %v2416
    %2582 = vmatpush.bf16.msra.mxu0 %v2414
    %2583 = vmatpush.bf16.msra.mxu0 %v2412
    %2584 = vmatpush.bf16.msra.mxu0 %v2410
    %2585 = vmatpush.bf16.msra.mxu0 %v2408
    %2586 = vmatmul.bf16.gmra.mxu0 %v2096
    %v2587 = vpop.f32.mrf.mxu0
    %v2588 = vadd.f32 %v2575, %v2587
    %v2589 = vpop.f32.mrf.mxu0
    %2590 = vdwg.mxu0
    %vm2591 = vcmp.gt.f32.partialorder %v2536, 0.0
    %vm2592 = vcmp.gt.f32.partialorder %v2588, 0.0
    %v2593 = vmul.f32 %v2536, 0.2
    %v2594 = vmul.f32 %v2588, 0.2
    %v2595 = vsel %vm2591, %v2536, %v2593
    %v2596 = vsel %vm2592, %v2588, %v2594
    %v2597 = vld [vmem:[%s5] sm:$0x3]
    %v2598 = vunpack.c.l.bf16 %v2597
    %v2600 = vperm.slane %v2598, 0
    %v2601 = vperm.slane %v2598, 2
    %v2604 = vperm.slane %v2600, 0
    %v2605 = vperm.slane %v2601, 0
    %v2606 = vmul.f32 %v2595, %v2604
    %v2607 = vmul.f32 %v2596, %v2605
    %v2608 = vadd.f32 %v2606, %v2607
    %2609 = vadd.xlane.f32.xlu0 %v2608
    %v2610 = vpop.xlane.xlu0 %2609
    %v2611 = vld [vmem:[#allocation2] sm:$0x1]
    %v2613 = vperm.slane %v2611, 0
    %v2615 = vadd.f32 %v2610, %v2613
    %v2616 = vsub.f32 0.0, %v2615
    %v2617 = vmul.f32 %v2616, 1.442695
    %v2618 = vpow.pop %v2617
    %v2619 = vadd.f32 %v2618, 1.0
    %v2620 = vrcp.pop %v2619
    %vm2621 = vcmask 7168
    %2622 = vst.msk [vmem:[%s7] sm:$0xff] %vm2621, %v2620
    // Predicated region
    $region46: #{tpu_custom_call.1} parent=1 // pred_check
      _
    $region47: #{tpu_custom_call.1} parent=1 // pred_check_branch
      %2624 = sbr.rel (0) target = $region49
    $region48: #{tpu_custom_call.1} parent=1 // pred_region
      _
    $region49: #{tpu_custom_call.1} parent=1 // pred_fallthru
      _
    // Predicated region
    $region50: #{tpu_custom_call.1} parent=1 // pred_check
      _
    $region51: #{tpu_custom_call.1} parent=1 // pred_check_branch
      %2626 = sbr.rel (0) target = $region53
    $region52: #{tpu_custom_call.1} parent=1 // pred_region
      _
    $region53: #{tpu_custom_call.1} parent=1 // pred_fallthru
      _
    %2627 = vsyncpa [#allocation4], 1
    %2628 = vsyncpa [#allocation6], 1
    %2629 = vsyncpa [#allocation9], 1

</llo_original>
